<compile_context>
chip_gen: v5e
topology: v5e:2x2
jax: 0.10.0
libtpu: 0.0.40
codegen_flags: <defaults>
</compile_context>

<pallas_src>
import jax
import jax.numpy as jnp
import numpy as np
from jax import lax
from jax.experimental import pallas as pl
from jax.experimental.pallas import tpu as pltpu


# ----------------------------------------------------------------------------
# Pallas kernel
# ----------------------------------------------------------------------------
def _make_kernel(H, W, C, d):
    HW = H * W

    def shifted(a, kh, kw, mask):
        # a: (C, HW).  Spatially shift the flattened HxW map by
        # ((kh-1)*d, (kw-1)*d) with zero padding: lane roll + validity mask.
        s = (kh - 1) * d * W + (kw - 1) * d
        if s != 0:
            a = pltpu.roll(a, (-s) % HW, axis=1)   # out[i] = a[(i + s) % HW]
        return a * mask                            # mask kills wrapped/OOB lanes

    def kernel(x_ref, w0ae_ref, w0ao_ref, wgrp_ref, w0ce_ref, w0co_ref,
               wdw_ref, w1b_ref, mask_ref, out_ref):
        x = x_ref[0]                                          # (C, HW) f32

        # ---- conv0[0]: 1x1 C -> 2C, ReLU6.  Even/odd output channels kept as
        #      two de-interleaved (C, HW) slabs (the grouped-conv groups). ----
        y_e = jnp.clip(jnp.dot(w0ae_ref[...], x,
                               preferred_element_type=jnp.float32), 0.0, 6.0)
        y_o = jnp.clip(jnp.dot(w0ao_ref[...], x,
                               preferred_element_type=jnp.float32), 0.0, 6.0)

        # ---- conv0[2]: grouped dilated 3x3 (groups=C, 2 ch/group), ReLU6 ----
        wg = wgrp_ref[...]                                    # (C, 36)
        acc_e = jnp.zeros((C, HW), jnp.float32)
        acc_o = jnp.zeros((C, HW), jnp.float32)
        for kh in range(3):
            for kw in range(3):
                t = kh * 3 + kw
                m = mask_ref[kh, kw]                          # (1, HW)
                she = shifted(y_e, kh, kw, m)
                sho = shifted(y_o, kh, kw, m)
                acc_e = (acc_e + wg[:, 4*t + 0:4*t + 1] * she
                               + wg[:, 4*t + 1:4*t + 2] * sho)
                acc_o = (acc_o + wg[:, 4*t + 2:4*t + 3] * she
                               + wg[:, 4*t + 3:4*t + 4] * sho)
        acc_e = jnp.clip(acc_e, 0.0, 6.0)
        acc_o = jnp.clip(acc_o, 0.0, 6.0)

        # ---- conv0[4]: 1x1 2C -> C ----
        z = (jnp.dot(w0ce_ref[...], acc_e, preferred_element_type=jnp.float32)
             + jnp.dot(w0co_ref[...], acc_o, preferred_element_type=jnp.float32))

        # ---- conv1[0]: depthwise dilated 3x3, ReLU6 ----
        wd = wdw_ref[...]                                     # (C, 9)
        acc2 = jnp.zeros((C, HW), jnp.float32)
        for kh in range(3):
            for kw in range(3):
                t = kh * 3 + kw
                m = mask_ref[kh, kw]
                acc2 = acc2 + wd[:, t:t + 1] * shifted(z, kh, kw, m)
        acc2 = jnp.clip(acc2, 0.0, 6.0)

        # ---- conv1[2]: 1x1 C -> C, then residual add ----
        res = jnp.dot(w1b_ref[...], acc2, preferred_element_type=jnp.float32)
        out_ref[0] = (res + x).astype(out_ref.dtype)

    return kernel


# ----------------------------------------------------------------------------
# Host-side helpers: zero-padding validity masks + wrapper
# ----------------------------------------------------------------------------
def _make_masks(H, W, d):
    h = np.arange(H)[:, None]
    w = np.arange(W)[None, :]
    masks = np.zeros((3, 3, 1, H * W), np.float32)
    for kh in range(3):
        for kw in range(3):
            dh, dw = (kh - 1) * d, (kw - 1) * d
            valid = ((h + dh >= 0) & (h + dh < H) &
                     (w + dw >= 0) & (w + dw < W))
            masks[kh, kw, 0] = valid.reshape(-1).astype(np.float32)
    return jnp.asarray(masks)


def depthwise_dilated_residual_block(x_nchw, kparams, dilation):
    N, C, H, W = x_nchw.shape
    d = int(dilation)
    HW = H * W
    w0a_e, w0a_o, wgrp, w0c_e, w0c_o, wdw, w1b = kparams
    masks = _make_masks(H, W, d)

    # Free reshape (contiguous NCHW -> N, C, H*W): no transpose, lane-dense.
    x = x_nchw.reshape(N, C, HW).astype(jnp.float32)

    const2 = lambda b: (0, 0)
    grid_spec = pltpu.PrefetchScalarGridSpec(
        num_scalar_prefetch=0,
        grid=(N,),
        in_specs=[
            pl.BlockSpec((1, C, HW), lambda b: (b, 0, 0)),
            pl.BlockSpec((C, C), const2),
            pl.BlockSpec((C, C), const2),
            pl.BlockSpec((C, 36), const2),
            pl.BlockSpec((C, C), const2),
            pl.BlockSpec((C, C), const2),
            pl.BlockSpec((C, 9), const2),
            pl.BlockSpec((C, C), const2),
            pl.BlockSpec((3, 3, 1, HW), lambda b: (0, 0, 0, 0)),
        ],
        out_specs=pl.BlockSpec((1, C, HW), lambda b: (b, 0, 0)),
    )
    out = pl.pallas_call(
        _make_kernel(H, W, C, d),
        out_shape=jax.ShapeDtypeStruct((N, C, HW), jnp.float32),
        grid_spec=grid_spec,
        compiler_params=pltpu.CompilerParams(
            dimension_semantics=("parallel",)),
    )(x, w0a_e, w0a_o, wgrp, w0c_e, w0c_o, wdw, w1b, masks)
    return out.reshape(N, C, H, W)


# ----------------------------------------------------------------------------
# Deterministic parameter init (PyTorch OIHW shapes) + conversion
# ----------------------------------------------------------------------------
def init_torch_params(key, channels):
    C = channels
    C2 = 2 * C
    k0, k1, k2, k3, k4 = jax.random.split(key, 5)
    W0a = jax.random.normal(k0, (C2, C, 1, 1), jnp.float32) * 0.2   # 1x1
    W0b = jax.random.normal(k1, (C2, 2, 3, 3), jnp.float32) * 0.2   # grouped (groups=C)
    W0c = jax.random.normal(k2, (C, C2, 1, 1), jnp.float32) * 0.2   # 1x1
    W1a = jax.random.normal(k3, (C, 1, 3, 3), jnp.float32) * 0.2    # depthwise (groups=C)
    W1b = jax.random.normal(k4, (C, C, 1, 1), jnp.float32) * 0.2    # 1x1
    return W0a, W0b, W0c, W1a, W1b


def convert_params(W0a, W0b, W0c, W1a, W1b):
    W0a = np.asarray(W0a); W0b = np.asarray(W0b); W0c = np.asarray(W0c)
    W1a = np.asarray(W1a); W1b = np.asarray(W1b)
    C2 = W0a.shape[0]; C = C2 // 2

    w0a_e = W0a[0::2, :, 0, 0].astype(np.float32)   # (C, C) even out channels
    w0a_o = W0a[1::2, :, 0, 0].astype(np.float32)   # (C, C) odd  out channels

    # Grouped 3x3 weights: per group g, per tap t, 4 scalars
    #   [even<-even, even<-odd, odd<-even, odd<-odd]  packed along lanes.
    wgrp = np.zeros((C, 36), np.float32)
    for g in range(C):
        for kh in range(3):
            for kw in range(3):
                t = kh * 3 + kw
                wgrp[g, 4*t + 0] = W0b[2*g,     0, kh, kw]
                wgrp[g, 4*t + 1] = W0b[2*g,     1, kh, kw]
                wgrp[g, 4*t + 2] = W0b[2*g + 1, 0, kh, kw]
                wgrp[g, 4*t + 3] = W0b[2*g + 1, 1, kh, kw]

    w0c_e = W0c[:, 0::2, 0, 0].astype(np.float32)   # (C, C)
    w0c_o = W0c[:, 1::2, 0, 0].astype(np.float32)   # (C, C)
    wdw = W1a[:, 0].reshape(C, 9).astype(np.float32)  # (C, 9) depthwise taps
    w1b = W1b[:, :, 0, 0].astype(np.float32)          # (C, C)

    return tuple(jnp.asarray(a) for a in
                 (w0a_e, w0a_o, wgrp, w0c_e, w0c_o, wdw, w1b))


# ----------------------------------------------------------------------------
# Pure-JAX reference (for correctness check)
# ----------------------------------------------------------------------------
def reference(x, W0a, W0b, W0c, W1a, W1b, d, C):
    dn = ('NCHW', 'OIHW', 'NCHW')
    pad = [(d, d), (d, d)]
    y = lax.conv_general_dilated(x, W0a, (1, 1), 'VALID', dimension_numbers=dn)
    y = jnp.clip(y, 0.0, 6.0)
    y = lax.conv_general_dilated(y, W0b, (1, 1), pad, rhs_dilation=(d, d),
                                 dimension_numbers=dn, feature_group_count=C)
    y = jnp.clip(y, 0.0, 6.0)
    y = lax.conv_general_dilated(y, W0c, (1, 1), 'VALID', dimension_numbers=dn)
    z = lax.conv_general_dilated(y, W1a, (1, 1), pad, rhs_dilation=(d, d),
                                 dimension_numbers=dn, feature_group_count=C)
    z = jnp.clip(z, 0.0, 6.0)
    z = lax.conv_general_dilated(z, W1b, (1, 1), 'VALID', dimension_numbers=dn)
    return z + x


# ----------------------------------------------------------------------------
if __name__ == "__main__":
    key = jax.random.PRNGKey(0)
    N, C, H, W = 2, 4, 16, 16
    dilation = 2
    reduced_channels = 2   # present in __init__ signature but unused in forward

    kx, kp = jax.random.split(key)
    x = jax.random.normal(kx, (N, C, H, W), jnp.float32)

    torch_params = init_torch_params(kp, C)
    kparams = convert_params(*torch_params)

    out = depthwise_dilated_residual_block(x, kparams, dilation)
    out = jax.block_until_ready(out)

    ref = reference(x, *torch_params, dilation, C)
    np.testing.assert_allclose(np.asarray(out), np.asarray(ref),
                               rtol=1e-2, atol=1e-2)
    print("KERNEL_OK")
</pallas_src>

<mosaic_0001>
module attributes {stable_mosaic.version = 11 : i64} {
  func.func @kernel(%arg0: i32, %arg1: memref<1x4x256xf32, #tpu.memory_space<vmem>>, %arg2: memref<4x4xf32, #tpu.memory_space<vmem>>, %arg3: memref<4x4xf32, #tpu.memory_space<vmem>>, %arg4: memref<4x36xf32, #tpu.memory_space<vmem>>, %arg5: memref<4x4xf32, #tpu.memory_space<vmem>>, %arg6: memref<4x4xf32, #tpu.memory_space<vmem>>, %arg7: memref<4x9xf32, #tpu.memory_space<vmem>>, %arg8: memref<4x4xf32, #tpu.memory_space<vmem>>, %arg9: memref<3x3x1x256xf32, #tpu.memory_space<vmem>>, %arg10: memref<1x4x256xf32, #tpu.memory_space<vmem>>) attributes {dimension_semantics = [#tpu.dimension_semantics<parallel>], iteration_bounds = array<i64: 2>, scalar_prefetch = 0 : i64, scratch_operands = 0 : i64, tpu.core_type = #tpu.core_type<tc>, window_params = [{transform_indices = @transform_0, window_bounds = array<i64: 1, 4, 256>}, {pipeline_mode = #tpu.pipeline_mode<synchronous>, transform_indices = @transform_1, window_bounds = array<i64: 4, 4>}, {pipeline_mode = #tpu.pipeline_mode<synchronous>, transform_indices = @transform_2, window_bounds = array<i64: 4, 4>}, {pipeline_mode = #tpu.pipeline_mode<synchronous>, transform_indices = @transform_3, window_bounds = array<i64: 4, 36>}, {pipeline_mode = #tpu.pipeline_mode<synchronous>, transform_indices = @transform_4, window_bounds = array<i64: 4, 4>}, {pipeline_mode = #tpu.pipeline_mode<synchronous>, transform_indices = @transform_5, window_bounds = array<i64: 4, 4>}, {pipeline_mode = #tpu.pipeline_mode<synchronous>, transform_indices = @transform_6, window_bounds = array<i64: 4, 9>}, {pipeline_mode = #tpu.pipeline_mode<synchronous>, transform_indices = @transform_7, window_bounds = array<i64: 4, 4>}, {pipeline_mode = #tpu.pipeline_mode<synchronous>, transform_indices = @transform_8, window_bounds = array<i64: 3, 3, 1, 256>}, {transform_indices = @transform_9, window_bounds = array<i64: 1, 4, 256>}]} {
    %c0 = arith.constant 0 : index
    %c0_0 = arith.constant 0 : index
    %c0_1 = arith.constant 0 : index
    %0 = vector.load %arg1[%c0, %c0_0, %c0_1] : memref<1x4x256xf32, #tpu.memory_space<vmem>>, vector<1x4x256xf32>
    %1 = vector.shape_cast %0 : vector<1x4x256xf32> to vector<4x256xf32>
    %c0_2 = arith.constant 0 : index
    %c0_3 = arith.constant 0 : index
    %2 = vector.load %arg2[%c0_2, %c0_3] : memref<4x4xf32, #tpu.memory_space<vmem>>, vector<4x4xf32>
    %cst = arith.constant dense<0.000000e+00> : vector<4x256xf32>
    %3 = tpu.matmul %2, %1, %cst {dimension_numbers = #tpu.dot_dimension_numbers<[1], [0], [0], [1], [0, 0, 1, 1], [], []>} : vector<4x4xf32>, vector<4x256xf32>, vector<4x256xf32> -> vector<4x256xf32>
    %cst_4 = arith.constant 0.000000e+00 : f32
    %cst_5 = arith.constant 6.000000e+00 : f32
    %4 = vector.broadcast %cst_4 : f32 to vector<4x256xf32>
    %5 = arith.maximumf %4, %3 : vector<4x256xf32>
    %6 = vector.broadcast %cst_5 : f32 to vector<4x256xf32>
    %7 = arith.minimumf %6, %5 : vector<4x256xf32>
    %c0_6 = arith.constant 0 : index
    %c0_7 = arith.constant 0 : index
    %8 = vector.load %arg3[%c0_6, %c0_7] : memref<4x4xf32, #tpu.memory_space<vmem>>, vector<4x4xf32>
    %cst_8 = arith.constant dense<0.000000e+00> : vector<4x256xf32>
    %9 = tpu.matmul %8, %1, %cst_8 {dimension_numbers = #tpu.dot_dimension_numbers<[1], [0], [0], [1], [0, 0, 1, 1], [], []>} : vector<4x4xf32>, vector<4x256xf32>, vector<4x256xf32> -> vector<4x256xf32>
    %cst_9 = arith.constant 0.000000e+00 : f32
    %cst_10 = arith.constant 6.000000e+00 : f32
    %10 = vector.broadcast %cst_9 : f32 to vector<4x256xf32>
    %11 = arith.maximumf %10, %9 : vector<4x256xf32>
    %12 = vector.broadcast %cst_10 : f32 to vector<4x256xf32>
    %13 = arith.minimumf %12, %11 : vector<4x256xf32>
    %c0_11 = arith.constant 0 : index
    %c0_12 = arith.constant 0 : index
    %14 = vector.load %arg4[%c0_11, %c0_12] : memref<4x36xf32, #tpu.memory_space<vmem>>, vector<4x36xf32>
    %cst_13 = arith.constant 0.000000e+00 : f32
    %15 = vector.broadcast %cst_13 : f32 to vector<4x256xf32>
    %cst_14 = arith.constant 0.000000e+00 : f32
    %16 = vector.broadcast %cst_14 : f32 to vector<4x256xf32>
    %c0_15 = arith.constant 0 : index
    %c0_16 = arith.constant 0 : index
    %c0_17 = arith.constant 0 : index
    %c0_18 = arith.constant 0 : index
    %17 = vector.load %arg9[%c0_15, %c0_16, %c0_17, %c0_18] : memref<3x3x1x256xf32, #tpu.memory_space<vmem>>, vector<1x1x1x256xf32>
    %18 = vector.shape_cast %17 : vector<1x1x1x256xf32> to vector<1x256xf32>
    %c34_i32 = arith.constant 34 : i32
    %19 = tpu.dynamic_rotate %7 by %c34_i32 dim 1 : vector<4x256xf32>, i32 -> vector<4x256xf32>
    %20 = vector.broadcast %18 : vector<1x256xf32> to vector<4x256xf32>
    %21 = arith.mulf %19, %20 : vector<4x256xf32>
    %c34_i32_19 = arith.constant 34 : i32
    %22 = tpu.dynamic_rotate %13 by %c34_i32_19 dim 1 : vector<4x256xf32>, i32 -> vector<4x256xf32>
    %23 = vector.broadcast %18 : vector<1x256xf32> to vector<4x256xf32>
    %24 = arith.mulf %22, %23 : vector<4x256xf32>
    %25 = vector.extract_strided_slice %14 {offsets = [0, 0], sizes = [4, 1], strides = [1, 1]} : vector<4x36xf32> to vector<4x1xf32>
    %26 = vector.broadcast %25 : vector<4x1xf32> to vector<4x256xf32>
    %27 = arith.mulf %26, %21 : vector<4x256xf32>
    %28 = arith.addf %15, %27 : vector<4x256xf32>
    %29 = vector.extract_strided_slice %14 {offsets = [0, 1], sizes = [4, 1], strides = [1, 1]} : vector<4x36xf32> to vector<4x1xf32>
    %30 = vector.broadcast %29 : vector<4x1xf32> to vector<4x256xf32>
    %31 = arith.mulf %30, %24 : vector<4x256xf32>
    %32 = arith.addf %28, %31 : vector<4x256xf32>
    %33 = vector.extract_strided_slice %14 {offsets = [0, 2], sizes = [4, 1], strides = [1, 1]} : vector<4x36xf32> to vector<4x1xf32>
    %34 = vector.broadcast %33 : vector<4x1xf32> to vector<4x256xf32>
    %35 = arith.mulf %34, %21 : vector<4x256xf32>
    %36 = arith.addf %16, %35 : vector<4x256xf32>
    %37 = vector.extract_strided_slice %14 {offsets = [0, 3], sizes = [4, 1], strides = [1, 1]} : vector<4x36xf32> to vector<4x1xf32>
    %38 = vector.broadcast %37 : vector<4x1xf32> to vector<4x256xf32>
    %39 = arith.mulf %38, %24 : vector<4x256xf32>
    %40 = arith.addf %36, %39 : vector<4x256xf32>
    %c0_20 = arith.constant 0 : index
    %c1 = arith.constant 1 : index
    %c0_21 = arith.constant 0 : index
    %c0_22 = arith.constant 0 : index
    %41 = vector.load %arg9[%c0_20, %c1, %c0_21, %c0_22] : memref<3x3x1x256xf32, #tpu.memory_space<vmem>>, vector<1x1x1x256xf32>
    %42 = vector.shape_cast %41 : vector<1x1x1x256xf32> to vector<1x256xf32>
    %c32_i32 = arith.constant 32 : i32
    %43 = tpu.dynamic_rotate %7 by %c32_i32 dim 1 : vector<4x256xf32>, i32 -> vector<4x256xf32>
    %44 = vector.broadcast %42 : vector<1x256xf32> to vector<4x256xf32>
    %45 = arith.mulf %43, %44 : vector<4x256xf32>
    %c32_i32_23 = arith.constant 32 : i32
    %46 = tpu.dynamic_rotate %13 by %c32_i32_23 dim 1 : vector<4x256xf32>, i32 -> vector<4x256xf32>
    %47 = vector.broadcast %42 : vector<1x256xf32> to vector<4x256xf32>
    %48 = arith.mulf %46, %47 : vector<4x256xf32>
    %49 = vector.extract_strided_slice %14 {offsets = [0, 4], sizes = [4, 1], strides = [1, 1]} : vector<4x36xf32> to vector<4x1xf32>
    %50 = vector.broadcast %49 : vector<4x1xf32> to vector<4x256xf32>
    %51 = arith.mulf %50, %45 : vector<4x256xf32>
    %52 = arith.addf %32, %51 : vector<4x256xf32>
    %53 = vector.extract_strided_slice %14 {offsets = [0, 5], sizes = [4, 1], strides = [1, 1]} : vector<4x36xf32> to vector<4x1xf32>
    %54 = vector.broadcast %53 : vector<4x1xf32> to vector<4x256xf32>
    %55 = arith.mulf %54, %48 : vector<4x256xf32>
    %56 = arith.addf %52, %55 : vector<4x256xf32>
    %57 = vector.extract_strided_slice %14 {offsets = [0, 6], sizes = [4, 1], strides = [1, 1]} : vector<4x36xf32> to vector<4x1xf32>
    %58 = vector.broadcast %57 : vector<4x1xf32> to vector<4x256xf32>
    %59 = arith.mulf %58, %45 : vector<4x256xf32>
    %60 = arith.addf %40, %59 : vector<4x256xf32>
    %61 = vector.extract_strided_slice %14 {offsets = [0, 7], sizes = [4, 1], strides = [1, 1]} : vector<4x36xf32> to vector<4x1xf32>
    %62 = vector.broadcast %61 : vector<4x1xf32> to vector<4x256xf32>
    %63 = arith.mulf %62, %48 : vector<4x256xf32>
    %64 = arith.addf %60, %63 : vector<4x256xf32>
    %c0_24 = arith.constant 0 : index
    %c2 = arith.constant 2 : index
    %c0_25 = arith.constant 0 : index
    %c0_26 = arith.constant 0 : index
    %65 = vector.load %arg9[%c0_24, %c2, %c0_25, %c0_26] : memref<3x3x1x256xf32, #tpu.memory_space<vmem>>, vector<1x1x1x256xf32>
    %66 = vector.shape_cast %65 : vector<1x1x1x256xf32> to vector<1x256xf32>
    %c30_i32 = arith.constant 30 : i32
    %67 = tpu.dynamic_rotate %7 by %c30_i32 dim 1 : vector<4x256xf32>, i32 -> vector<4x256xf32>
    %68 = vector.broadcast %66 : vector<1x256xf32> to vector<4x256xf32>
    %69 = arith.mulf %67, %68 : vector<4x256xf32>
    %c30_i32_27 = arith.constant 30 : i32
    %70 = tpu.dynamic_rotate %13 by %c30_i32_27 dim 1 : vector<4x256xf32>, i32 -> vector<4x256xf32>
    %71 = vector.broadcast %66 : vector<1x256xf32> to vector<4x256xf32>
    %72 = arith.mulf %70, %71 : vector<4x256xf32>
    %73 = vector.extract_strided_slice %14 {offsets = [0, 8], sizes = [4, 1], strides = [1, 1]} : vector<4x36xf32> to vector<4x1xf32>
    %74 = vector.broadcast %73 : vector<4x1xf32> to vector<4x256xf32>
    %75 = arith.mulf %74, %69 : vector<4x256xf32>
    %76 = arith.addf %56, %75 : vector<4x256xf32>
    %77 = vector.extract_strided_slice %14 {offsets = [0, 9], sizes = [4, 1], strides = [1, 1]} : vector<4x36xf32> to vector<4x1xf32>
    %78 = vector.broadcast %77 : vector<4x1xf32> to vector<4x256xf32>
    %79 = arith.mulf %78, %72 : vector<4x256xf32>
    %80 = arith.addf %76, %79 : vector<4x256xf32>
    %81 = vector.extract_strided_slice %14 {offsets = [0, 10], sizes = [4, 1], strides = [1, 1]} : vector<4x36xf32> to vector<4x1xf32>
    %82 = vector.broadcast %81 : vector<4x1xf32> to vector<4x256xf32>
    %83 = arith.mulf %82, %69 : vector<4x256xf32>
    %84 = arith.addf %64, %83 : vector<4x256xf32>
    %85 = vector.extract_strided_slice %14 {offsets = [0, 11], sizes = [4, 1], strides = [1, 1]} : vector<4x36xf32> to vector<4x1xf32>
    %86 = vector.broadcast %85 : vector<4x1xf32> to vector<4x256xf32>
    %87 = arith.mulf %86, %72 : vector<4x256xf32>
    %88 = arith.addf %84, %87 : vector<4x256xf32>
    %c1_28 = arith.constant 1 : index
    %c0_29 = arith.constant 0 : index
    %c0_30 = arith.constant 0 : index
    %c0_31 = arith.constant 0 : index
    %89 = vector.load %arg9[%c1_28, %c0_29, %c0_30, %c0_31] : memref<3x3x1x256xf32, #tpu.memory_space<vmem>>, vector<1x1x1x256xf32>
    %90 = vector.shape_cast %89 : vector<1x1x1x256xf32> to vector<1x256xf32>
    %c2_i32 = arith.constant 2 : i32
    %91 = tpu.dynamic_rotate %7 by %c2_i32 dim 1 : vector<4x256xf32>, i32 -> vector<4x256xf32>
    %92 = vector.broadcast %90 : vector<1x256xf32> to vector<4x256xf32>
    %93 = arith.mulf %91, %92 : vector<4x256xf32>
    %c2_i32_32 = arith.constant 2 : i32
    %94 = tpu.dynamic_rotate %13 by %c2_i32_32 dim 1 : vector<4x256xf32>, i32 -> vector<4x256xf32>
    %95 = vector.broadcast %90 : vector<1x256xf32> to vector<4x256xf32>
    %96 = arith.mulf %94, %95 : vector<4x256xf32>
    %97 = vector.extract_strided_slice %14 {offsets = [0, 12], sizes = [4, 1], strides = [1, 1]} : vector<4x36xf32> to vector<4x1xf32>
    %98 = vector.broadcast %97 : vector<4x1xf32> to vector<4x256xf32>
    %99 = arith.mulf %98, %93 : vector<4x256xf32>
    %100 = arith.addf %80, %99 : vector<4x256xf32>
    %101 = vector.extract_strided_slice %14 {offsets = [0, 13], sizes = [4, 1], strides = [1, 1]} : vector<4x36xf32> to vector<4x1xf32>
    %102 = vector.broadcast %101 : vector<4x1xf32> to vector<4x256xf32>
    %103 = arith.mulf %102, %96 : vector<4x256xf32>
    %104 = arith.addf %100, %103 : vector<4x256xf32>
    %105 = vector.extract_strided_slice %14 {offsets = [0, 14], sizes = [4, 1], strides = [1, 1]} : vector<4x36xf32> to vector<4x1xf32>
    %106 = vector.broadcast %105 : vector<4x1xf32> to vector<4x256xf32>
    %107 = arith.mulf %106, %93 : vector<4x256xf32>
    %108 = arith.addf %88, %107 : vector<4x256xf32>
    %109 = vector.extract_strided_slice %14 {offsets = [0, 15], sizes = [4, 1], strides = [1, 1]} : vector<4x36xf32> to vector<4x1xf32>
    %110 = vector.broadcast %109 : vector<4x1xf32> to vector<4x256xf32>
    %111 = arith.mulf %110, %96 : vector<4x256xf32>
    %112 = arith.addf %108, %111 : vector<4x256xf32>
    %c1_33 = arith.constant 1 : index
    %c1_34 = arith.constant 1 : index
    %c0_35 = arith.constant 0 : index
    %c0_36 = arith.constant 0 : index
    %113 = vector.load %arg9[%c1_33, %c1_34, %c0_35, %c0_36] : memref<3x3x1x256xf32, #tpu.memory_space<vmem>>, vector<1x1x1x256xf32>
    %114 = vector.shape_cast %113 : vector<1x1x1x256xf32> to vector<1x256xf32>
    %115 = vector.broadcast %114 : vector<1x256xf32> to vector<4x256xf32>
    %116 = arith.mulf %7, %115 : vector<4x256xf32>
    %117 = vector.broadcast %114 : vector<1x256xf32> to vector<4x256xf32>
    %118 = arith.mulf %13, %117 : vector<4x256xf32>
    %119 = vector.extract_strided_slice %14 {offsets = [0, 16], sizes = [4, 1], strides = [1, 1]} : vector<4x36xf32> to vector<4x1xf32>
    %120 = vector.broadcast %119 : vector<4x1xf32> to vector<4x256xf32>
    %121 = arith.mulf %120, %116 : vector<4x256xf32>
    %122 = arith.addf %104, %121 : vector<4x256xf32>
    %123 = vector.extract_strided_slice %14 {offsets = [0, 17], sizes = [4, 1], strides = [1, 1]} : vector<4x36xf32> to vector<4x1xf32>
    %124 = vector.broadcast %123 : vector<4x1xf32> to vector<4x256xf32>
    %125 = arith.mulf %124, %118 : vector<4x256xf32>
    %126 = arith.addf %122, %125 : vector<4x256xf32>
    %127 = vector.extract_strided_slice %14 {offsets = [0, 18], sizes = [4, 1], strides = [1, 1]} : vector<4x36xf32> to vector<4x1xf32>
    %128 = vector.broadcast %127 : vector<4x1xf32> to vector<4x256xf32>
    %129 = arith.mulf %128, %116 : vector<4x256xf32>
    %130 = arith.addf %112, %129 : vector<4x256xf32>
    %131 = vector.extract_strided_slice %14 {offsets = [0, 19], sizes = [4, 1], strides = [1, 1]} : vector<4x36xf32> to vector<4x1xf32>
    %132 = vector.broadcast %131 : vector<4x1xf32> to vector<4x256xf32>
    %133 = arith.mulf %132, %118 : vector<4x256xf32>
    %134 = arith.addf %130, %133 : vector<4x256xf32>
    %c1_37 = arith.constant 1 : index
    %c2_38 = arith.constant 2 : index
    %c0_39 = arith.constant 0 : index
    %c0_40 = arith.constant 0 : index
    %135 = vector.load %arg9[%c1_37, %c2_38, %c0_39, %c0_40] : memref<3x3x1x256xf32, #tpu.memory_space<vmem>>, vector<1x1x1x256xf32>
    %136 = vector.shape_cast %135 : vector<1x1x1x256xf32> to vector<1x256xf32>
    %c254_i32 = arith.constant 254 : i32
    %137 = tpu.dynamic_rotate %7 by %c254_i32 dim 1 : vector<4x256xf32>, i32 -> vector<4x256xf32>
    %138 = vector.broadcast %136 : vector<1x256xf32> to vector<4x256xf32>
    %139 = arith.mulf %137, %138 : vector<4x256xf32>
    %c254_i32_41 = arith.constant 254 : i32
    %140 = tpu.dynamic_rotate %13 by %c254_i32_41 dim 1 : vector<4x256xf32>, i32 -> vector<4x256xf32>
    %141 = vector.broadcast %136 : vector<1x256xf32> to vector<4x256xf32>
    %142 = arith.mulf %140, %141 : vector<4x256xf32>
    %143 = vector.extract_strided_slice %14 {offsets = [0, 20], sizes = [4, 1], strides = [1, 1]} : vector<4x36xf32> to vector<4x1xf32>
    %144 = vector.broadcast %143 : vector<4x1xf32> to vector<4x256xf32>
    %145 = arith.mulf %144, %139 : vector<4x256xf32>
    %146 = arith.addf %126, %145 : vector<4x256xf32>
    %147 = vector.extract_strided_slice %14 {offsets = [0, 21], sizes = [4, 1], strides = [1, 1]} : vector<4x36xf32> to vector<4x1xf32>
    %148 = vector.broadcast %147 : vector<4x1xf32> to vector<4x256xf32>
    %149 = arith.mulf %148, %142 : vector<4x256xf32>
    %150 = arith.addf %146, %149 : vector<4x256xf32>
    %151 = vector.extract_strided_slice %14 {offsets = [0, 22], sizes = [4, 1], strides = [1, 1]} : vector<4x36xf32> to vector<4x1xf32>
    %152 = vector.broadcast %151 : vector<4x1xf32> to vector<4x256xf32>
    %153 = arith.mulf %152, %139 : vector<4x256xf32>
    %154 = arith.addf %134, %153 : vector<4x256xf32>
    %155 = vector.extract_strided_slice %14 {offsets = [0, 23], sizes = [4, 1], strides = [1, 1]} : vector<4x36xf32> to vector<4x1xf32>
    %156 = vector.broadcast %155 : vector<4x1xf32> to vector<4x256xf32>
    %157 = arith.mulf %156, %142 : vector<4x256xf32>
    %158 = arith.addf %154, %157 : vector<4x256xf32>
    %c2_42 = arith.constant 2 : index
    %c0_43 = arith.constant 0 : index
    %c0_44 = arith.constant 0 : index
    %c0_45 = arith.constant 0 : index
    %159 = vector.load %arg9[%c2_42, %c0_43, %c0_44, %c0_45] : memref<3x3x1x256xf32, #tpu.memory_space<vmem>>, vector<1x1x1x256xf32>
    %160 = vector.shape_cast %159 : vector<1x1x1x256xf32> to vector<1x256xf32>
    %c226_i32 = arith.constant 226 : i32
    %161 = tpu.dynamic_rotate %7 by %c226_i32 dim 1 : vector<4x256xf32>, i32 -> vector<4x256xf32>
    %162 = vector.broadcast %160 : vector<1x256xf32> to vector<4x256xf32>
    %163 = arith.mulf %161, %162 : vector<4x256xf32>
    %c226_i32_46 = arith.constant 226 : i32
    %164 = tpu.dynamic_rotate %13 by %c226_i32_46 dim 1 : vector<4x256xf32>, i32 -> vector<4x256xf32>
    %165 = vector.broadcast %160 : vector<1x256xf32> to vector<4x256xf32>
    %166 = arith.mulf %164, %165 : vector<4x256xf32>
    %167 = vector.extract_strided_slice %14 {offsets = [0, 24], sizes = [4, 1], strides = [1, 1]} : vector<4x36xf32> to vector<4x1xf32>
    %168 = vector.broadcast %167 : vector<4x1xf32> to vector<4x256xf32>
    %169 = arith.mulf %168, %163 : vector<4x256xf32>
    %170 = arith.addf %150, %169 : vector<4x256xf32>
    %171 = vector.extract_strided_slice %14 {offsets = [0, 25], sizes = [4, 1], strides = [1, 1]} : vector<4x36xf32> to vector<4x1xf32>
    %172 = vector.broadcast %171 : vector<4x1xf32> to vector<4x256xf32>
    %173 = arith.mulf %172, %166 : vector<4x256xf32>
    %174 = arith.addf %170, %173 : vector<4x256xf32>
    %175 = vector.extract_strided_slice %14 {offsets = [0, 26], sizes = [4, 1], strides = [1, 1]} : vector<4x36xf32> to vector<4x1xf32>
    %176 = vector.broadcast %175 : vector<4x1xf32> to vector<4x256xf32>
    %177 = arith.mulf %176, %163 : vector<4x256xf32>
    %178 = arith.addf %158, %177 : vector<4x256xf32>
    %179 = vector.extract_strided_slice %14 {offsets = [0, 27], sizes = [4, 1], strides = [1, 1]} : vector<4x36xf32> to vector<4x1xf32>
    %180 = vector.broadcast %179 : vector<4x1xf32> to vector<4x256xf32>
    %181 = arith.mulf %180, %166 : vector<4x256xf32>
    %182 = arith.addf %178, %181 : vector<4x256xf32>
    %c2_47 = arith.constant 2 : index
    %c1_48 = arith.constant 1 : index
    %c0_49 = arith.constant 0 : index
    %c0_50 = arith.constant 0 : index
    %183 = vector.load %arg9[%c2_47, %c1_48, %c0_49, %c0_50] : memref<3x3x1x256xf32, #tpu.memory_space<vmem>>, vector<1x1x1x256xf32>
    %184 = vector.shape_cast %183 : vector<1x1x1x256xf32> to vector<1x256xf32>
    %c224_i32 = arith.constant 224 : i32
    %185 = tpu.dynamic_rotate %7 by %c224_i32 dim 1 : vector<4x256xf32>, i32 -> vector<4x256xf32>
    %186 = vector.broadcast %184 : vector<1x256xf32> to vector<4x256xf32>
    %187 = arith.mulf %185, %186 : vector<4x256xf32>
    %c224_i32_51 = arith.constant 224 : i32
    %188 = tpu.dynamic_rotate %13 by %c224_i32_51 dim 1 : vector<4x256xf32>, i32 -> vector<4x256xf32>
    %189 = vector.broadcast %184 : vector<1x256xf32> to vector<4x256xf32>
    %190 = arith.mulf %188, %189 : vector<4x256xf32>
    %191 = vector.extract_strided_slice %14 {offsets = [0, 28], sizes = [4, 1], strides = [1, 1]} : vector<4x36xf32> to vector<4x1xf32>
    %192 = vector.broadcast %191 : vector<4x1xf32> to vector<4x256xf32>
    %193 = arith.mulf %192, %187 : vector<4x256xf32>
    %194 = arith.addf %174, %193 : vector<4x256xf32>
    %195 = vector.extract_strided_slice %14 {offsets = [0, 29], sizes = [4, 1], strides = [1, 1]} : vector<4x36xf32> to vector<4x1xf32>
    %196 = vector.broadcast %195 : vector<4x1xf32> to vector<4x256xf32>
    %197 = arith.mulf %196, %190 : vector<4x256xf32>
    %198 = arith.addf %194, %197 : vector<4x256xf32>
    %199 = vector.extract_strided_slice %14 {offsets = [0, 30], sizes = [4, 1], strides = [1, 1]} : vector<4x36xf32> to vector<4x1xf32>
    %200 = vector.broadcast %199 : vector<4x1xf32> to vector<4x256xf32>
    %201 = arith.mulf %200, %187 : vector<4x256xf32>
    %202 = arith.addf %182, %201 : vector<4x256xf32>
    %203 = vector.extract_strided_slice %14 {offsets = [0, 31], sizes = [4, 1], strides = [1, 1]} : vector<4x36xf32> to vector<4x1xf32>
    %204 = vector.broadcast %203 : vector<4x1xf32> to vector<4x256xf32>
    %205 = arith.mulf %204, %190 : vector<4x256xf32>
    %206 = arith.addf %202, %205 : vector<4x256xf32>
    %c2_52 = arith.constant 2 : index
    %c2_53 = arith.constant 2 : index
    %c0_54 = arith.constant 0 : index
    %c0_55 = arith.constant 0 : index
    %207 = vector.load %arg9[%c2_52, %c2_53, %c0_54, %c0_55] : memref<3x3x1x256xf32, #tpu.memory_space<vmem>>, vector<1x1x1x256xf32>
    %208 = vector.shape_cast %207 : vector<1x1x1x256xf32> to vector<1x256xf32>
    %c222_i32 = arith.constant 222 : i32
    %209 = tpu.dynamic_rotate %7 by %c222_i32 dim 1 : vector<4x256xf32>, i32 -> vector<4x256xf32>
    %210 = vector.broadcast %208 : vector<1x256xf32> to vector<4x256xf32>
    %211 = arith.mulf %209, %210 : vector<4x256xf32>
    %c222_i32_56 = arith.constant 222 : i32
    %212 = tpu.dynamic_rotate %13 by %c222_i32_56 dim 1 : vector<4x256xf32>, i32 -> vector<4x256xf32>
    %213 = vector.broadcast %208 : vector<1x256xf32> to vector<4x256xf32>
    %214 = arith.mulf %212, %213 : vector<4x256xf32>
    %215 = vector.extract_strided_slice %14 {offsets = [0, 32], sizes = [4, 1], strides = [1, 1]} : vector<4x36xf32> to vector<4x1xf32>
    %216 = vector.broadcast %215 : vector<4x1xf32> to vector<4x256xf32>
    %217 = arith.mulf %216, %211 : vector<4x256xf32>
    %218 = arith.addf %198, %217 : vector<4x256xf32>
    %219 = vector.extract_strided_slice %14 {offsets = [0, 33], sizes = [4, 1], strides = [1, 1]} : vector<4x36xf32> to vector<4x1xf32>
    %220 = vector.broadcast %219 : vector<4x1xf32> to vector<4x256xf32>
    %221 = arith.mulf %220, %214 : vector<4x256xf32>
    %222 = arith.addf %218, %221 : vector<4x256xf32>
    %223 = vector.extract_strided_slice %14 {offsets = [0, 34], sizes = [4, 1], strides = [1, 1]} : vector<4x36xf32> to vector<4x1xf32>
    %224 = vector.broadcast %223 : vector<4x1xf32> to vector<4x256xf32>
    %225 = arith.mulf %224, %211 : vector<4x256xf32>
    %226 = arith.addf %206, %225 : vector<4x256xf32>
    %227 = vector.extract_strided_slice %14 {offsets = [0, 35], sizes = [4, 1], strides = [1, 1]} : vector<4x36xf32> to vector<4x1xf32>
    %228 = vector.broadcast %227 : vector<4x1xf32> to vector<4x256xf32>
    %229 = arith.mulf %228, %214 : vector<4x256xf32>
    %230 = arith.addf %226, %229 : vector<4x256xf32>
    %cst_57 = arith.constant 0.000000e+00 : f32
    %cst_58 = arith.constant 6.000000e+00 : f32
    %231 = vector.broadcast %cst_57 : f32 to vector<4x256xf32>
    %232 = arith.maximumf %231, %222 : vector<4x256xf32>
    %233 = vector.broadcast %cst_58 : f32 to vector<4x256xf32>
    %234 = arith.minimumf %233, %232 : vector<4x256xf32>
    %cst_59 = arith.constant 0.000000e+00 : f32
    %cst_60 = arith.constant 6.000000e+00 : f32
    %235 = vector.broadcast %cst_59 : f32 to vector<4x256xf32>
    %236 = arith.maximumf %235, %230 : vector<4x256xf32>
    %237 = vector.broadcast %cst_60 : f32 to vector<4x256xf32>
    %238 = arith.minimumf %237, %236 : vector<4x256xf32>
    %c0_61 = arith.constant 0 : index
    %c0_62 = arith.constant 0 : index
    %239 = vector.load %arg5[%c0_61, %c0_62] : memref<4x4xf32, #tpu.memory_space<vmem>>, vector<4x4xf32>
    %cst_63 = arith.constant dense<0.000000e+00> : vector<4x256xf32>
    %240 = tpu.matmul %239, %234, %cst_63 {dimension_numbers = #tpu.dot_dimension_numbers<[1], [0], [0], [1], [0, 0, 1, 1], [], []>} : vector<4x4xf32>, vector<4x256xf32>, vector<4x256xf32> -> vector<4x256xf32>
    %c0_64 = arith.constant 0 : index
    %c0_65 = arith.constant 0 : index
    %241 = vector.load %arg6[%c0_64, %c0_65] : memref<4x4xf32, #tpu.memory_space<vmem>>, vector<4x4xf32>
    %cst_66 = arith.constant dense<0.000000e+00> : vector<4x256xf32>
    %242 = tpu.matmul %241, %238, %cst_66 {dimension_numbers = #tpu.dot_dimension_numbers<[1], [0], [0], [1], [0, 0, 1, 1], [], []>} : vector<4x4xf32>, vector<4x256xf32>, vector<4x256xf32> -> vector<4x256xf32>
    %243 = arith.addf %240, %242 : vector<4x256xf32>
    %c0_67 = arith.constant 0 : index
    %c0_68 = arith.constant 0 : index
    %244 = vector.load %arg7[%c0_67, %c0_68] : memref<4x9xf32, #tpu.memory_space<vmem>>, vector<4x9xf32>
    %cst_69 = arith.constant 0.000000e+00 : f32
    %245 = vector.broadcast %cst_69 : f32 to vector<4x256xf32>
    %c0_70 = arith.constant 0 : index
    %c0_71 = arith.constant 0 : index
    %c0_72 = arith.constant 0 : index
    %c0_73 = arith.constant 0 : index
    %246 = vector.load %arg9[%c0_70, %c0_71, %c0_72, %c0_73] : memref<3x3x1x256xf32, #tpu.memory_space<vmem>>, vector<1x1x1x256xf32>
    %247 = vector.shape_cast %246 : vector<1x1x1x256xf32> to vector<1x256xf32>
    %248 = vector.extract_strided_slice %244 {offsets = [0, 0], sizes = [4, 1], strides = [1, 1]} : vector<4x9xf32> to vector<4x1xf32>
    %c34_i32_74 = arith.constant 34 : i32
    %249 = tpu.dynamic_rotate %243 by %c34_i32_74 dim 1 : vector<4x256xf32>, i32 -> vector<4x256xf32>
    %250 = vector.broadcast %247 : vector<1x256xf32> to vector<4x256xf32>
    %251 = arith.mulf %249, %250 : vector<4x256xf32>
    %252 = vector.broadcast %248 : vector<4x1xf32> to vector<4x256xf32>
    %253 = arith.mulf %252, %251 : vector<4x256xf32>
    %254 = arith.addf %245, %253 : vector<4x256xf32>
    %c0_75 = arith.constant 0 : index
    %c1_76 = arith.constant 1 : index
    %c0_77 = arith.constant 0 : index
    %c0_78 = arith.constant 0 : index
    %255 = vector.load %arg9[%c0_75, %c1_76, %c0_77, %c0_78] : memref<3x3x1x256xf32, #tpu.memory_space<vmem>>, vector<1x1x1x256xf32>
    %256 = vector.shape_cast %255 : vector<1x1x1x256xf32> to vector<1x256xf32>
    %257 = vector.extract_strided_slice %244 {offsets = [0, 1], sizes = [4, 1], strides = [1, 1]} : vector<4x9xf32> to vector<4x1xf32>
    %c32_i32_79 = arith.constant 32 : i32
    %258 = tpu.dynamic_rotate %243 by %c32_i32_79 dim 1 : vector<4x256xf32>, i32 -> vector<4x256xf32>
    %259 = vector.broadcast %256 : vector<1x256xf32> to vector<4x256xf32>
    %260 = arith.mulf %258, %259 : vector<4x256xf32>
    %261 = vector.broadcast %257 : vector<4x1xf32> to vector<4x256xf32>
    %262 = arith.mulf %261, %260 : vector<4x256xf32>
    %263 = arith.addf %254, %262 : vector<4x256xf32>
    %c0_80 = arith.constant 0 : index
    %c2_81 = arith.constant 2 : index
    %c0_82 = arith.constant 0 : index
    %c0_83 = arith.constant 0 : index
    %264 = vector.load %arg9[%c0_80, %c2_81, %c0_82, %c0_83] : memref<3x3x1x256xf32, #tpu.memory_space<vmem>>, vector<1x1x1x256xf32>
    %265 = vector.shape_cast %264 : vector<1x1x1x256xf32> to vector<1x256xf32>
    %266 = vector.extract_strided_slice %244 {offsets = [0, 2], sizes = [4, 1], strides = [1, 1]} : vector<4x9xf32> to vector<4x1xf32>
    %c30_i32_84 = arith.constant 30 : i32
    %267 = tpu.dynamic_rotate %243 by %c30_i32_84 dim 1 : vector<4x256xf32>, i32 -> vector<4x256xf32>
    %268 = vector.broadcast %265 : vector<1x256xf32> to vector<4x256xf32>
    %269 = arith.mulf %267, %268 : vector<4x256xf32>
    %270 = vector.broadcast %266 : vector<4x1xf32> to vector<4x256xf32>
    %271 = arith.mulf %270, %269 : vector<4x256xf32>
    %272 = arith.addf %263, %271 : vector<4x256xf32>
    %c1_85 = arith.constant 1 : index
    %c0_86 = arith.constant 0 : index
    %c0_87 = arith.constant 0 : index
    %c0_88 = arith.constant 0 : index
    %273 = vector.load %arg9[%c1_85, %c0_86, %c0_87, %c0_88] : memref<3x3x1x256xf32, #tpu.memory_space<vmem>>, vector<1x1x1x256xf32>
    %274 = vector.shape_cast %273 : vector<1x1x1x256xf32> to vector<1x256xf32>
    %275 = vector.extract_strided_slice %244 {offsets = [0, 3], sizes = [4, 1], strides = [1, 1]} : vector<4x9xf32> to vector<4x1xf32>
    %c2_i32_89 = arith.constant 2 : i32
    %276 = tpu.dynamic_rotate %243 by %c2_i32_89 dim 1 : vector<4x256xf32>, i32 -> vector<4x256xf32>
    %277 = vector.broadcast %274 : vector<1x256xf32> to vector<4x256xf32>
    %278 = arith.mulf %276, %277 : vector<4x256xf32>
    %279 = vector.broadcast %275 : vector<4x1xf32> to vector<4x256xf32>
    %280 = arith.mulf %279, %278 : vector<4x256xf32>
    %281 = arith.addf %272, %280 : vector<4x256xf32>
    %c1_90 = arith.constant 1 : index
    %c1_91 = arith.constant 1 : index
    %c0_92 = arith.constant 0 : index
    %c0_93 = arith.constant 0 : index
    %282 = vector.load %arg9[%c1_90, %c1_91, %c0_92, %c0_93] : memref<3x3x1x256xf32, #tpu.memory_space<vmem>>, vector<1x1x1x256xf32>
    %283 = vector.shape_cast %282 : vector<1x1x1x256xf32> to vector<1x256xf32>
    %284 = vector.extract_strided_slice %244 {offsets = [0, 4], sizes = [4, 1], strides = [1, 1]} : vector<4x9xf32> to vector<4x1xf32>
    %285 = vector.broadcast %283 : vector<1x256xf32> to vector<4x256xf32>
    %286 = arith.mulf %243, %285 : vector<4x256xf32>
    %287 = vector.broadcast %284 : vector<4x1xf32> to vector<4x256xf32>
    %288 = arith.mulf %287, %286 : vector<4x256xf32>
    %289 = arith.addf %281, %288 : vector<4x256xf32>
    %c1_94 = arith.constant 1 : index
    %c2_95 = arith.constant 2 : index
    %c0_96 = arith.constant 0 : index
    %c0_97 = arith.constant 0 : index
    %290 = vector.load %arg9[%c1_94, %c2_95, %c0_96, %c0_97] : memref<3x3x1x256xf32, #tpu.memory_space<vmem>>, vector<1x1x1x256xf32>
    %291 = vector.shape_cast %290 : vector<1x1x1x256xf32> to vector<1x256xf32>
    %292 = vector.extract_strided_slice %244 {offsets = [0, 5], sizes = [4, 1], strides = [1, 1]} : vector<4x9xf32> to vector<4x1xf32>
    %c254_i32_98 = arith.constant 254 : i32
    %293 = tpu.dynamic_rotate %243 by %c254_i32_98 dim 1 : vector<4x256xf32>, i32 -> vector<4x256xf32>
    %294 = vector.broadcast %291 : vector<1x256xf32> to vector<4x256xf32>
    %295 = arith.mulf %293, %294 : vector<4x256xf32>
    %296 = vector.broadcast %292 : vector<4x1xf32> to vector<4x256xf32>
    %297 = arith.mulf %296, %295 : vector<4x256xf32>
    %298 = arith.addf %289, %297 : vector<4x256xf32>
    %c2_99 = arith.constant 2 : index
    %c0_100 = arith.constant 0 : index
    %c0_101 = arith.constant 0 : index
    %c0_102 = arith.constant 0 : index
    %299 = vector.load %arg9[%c2_99, %c0_100, %c0_101, %c0_102] : memref<3x3x1x256xf32, #tpu.memory_space<vmem>>, vector<1x1x1x256xf32>
    %300 = vector.shape_cast %299 : vector<1x1x1x256xf32> to vector<1x256xf32>
    %301 = vector.extract_strided_slice %244 {offsets = [0, 6], sizes = [4, 1], strides = [1, 1]} : vector<4x9xf32> to vector<4x1xf32>
    %c226_i32_103 = arith.constant 226 : i32
    %302 = tpu.dynamic_rotate %243 by %c226_i32_103 dim 1 : vector<4x256xf32>, i32 -> vector<4x256xf32>
    %303 = vector.broadcast %300 : vector<1x256xf32> to vector<4x256xf32>
    %304 = arith.mulf %302, %303 : vector<4x256xf32>
    %305 = vector.broadcast %301 : vector<4x1xf32> to vector<4x256xf32>
    %306 = arith.mulf %305, %304 : vector<4x256xf32>
    %307 = arith.addf %298, %306 : vector<4x256xf32>
    %c2_104 = arith.constant 2 : index
    %c1_105 = arith.constant 1 : index
    %c0_106 = arith.constant 0 : index
    %c0_107 = arith.constant 0 : index
    %308 = vector.load %arg9[%c2_104, %c1_105, %c0_106, %c0_107] : memref<3x3x1x256xf32, #tpu.memory_space<vmem>>, vector<1x1x1x256xf32>
    %309 = vector.shape_cast %308 : vector<1x1x1x256xf32> to vector<1x256xf32>
    %310 = vector.extract_strided_slice %244 {offsets = [0, 7], sizes = [4, 1], strides = [1, 1]} : vector<4x9xf32> to vector<4x1xf32>
    %c224_i32_108 = arith.constant 224 : i32
    %311 = tpu.dynamic_rotate %243 by %c224_i32_108 dim 1 : vector<4x256xf32>, i32 -> vector<4x256xf32>
    %312 = vector.broadcast %309 : vector<1x256xf32> to vector<4x256xf32>
    %313 = arith.mulf %311, %312 : vector<4x256xf32>
    %314 = vector.broadcast %310 : vector<4x1xf32> to vector<4x256xf32>
    %315 = arith.mulf %314, %313 : vector<4x256xf32>
    %316 = arith.addf %307, %315 : vector<4x256xf32>
    %c2_109 = arith.constant 2 : index
    %c2_110 = arith.constant 2 : index
    %c0_111 = arith.constant 0 : index
    %c0_112 = arith.constant 0 : index
    %317 = vector.load %arg9[%c2_109, %c2_110, %c0_111, %c0_112] : memref<3x3x1x256xf32, #tpu.memory_space<vmem>>, vector<1x1x1x256xf32>
    %318 = vector.shape_cast %317 : vector<1x1x1x256xf32> to vector<1x256xf32>
    %319 = vector.extract_strided_slice %244 {offsets = [0, 8], sizes = [4, 1], strides = [1, 1]} : vector<4x9xf32> to vector<4x1xf32>
    %c222_i32_113 = arith.constant 222 : i32
    %320 = tpu.dynamic_rotate %243 by %c222_i32_113 dim 1 : vector<4x256xf32>, i32 -> vector<4x256xf32>
    %321 = vector.broadcast %318 : vector<1x256xf32> to vector<4x256xf32>
    %322 = arith.mulf %320, %321 : vector<4x256xf32>
    %323 = vector.broadcast %319 : vector<4x1xf32> to vector<4x256xf32>
    %324 = arith.mulf %323, %322 : vector<4x256xf32>
    %325 = arith.addf %316, %324 : vector<4x256xf32>
    %cst_114 = arith.constant 0.000000e+00 : f32
    %cst_115 = arith.constant 6.000000e+00 : f32
    %326 = vector.broadcast %cst_114 : f32 to vector<4x256xf32>
    %327 = arith.maximumf %326, %325 : vector<4x256xf32>
    %328 = vector.broadcast %cst_115 : f32 to vector<4x256xf32>
    %329 = arith.minimumf %328, %327 : vector<4x256xf32>
    %c0_116 = arith.constant 0 : index
    %c0_117 = arith.constant 0 : index
    %330 = vector.load %arg8[%c0_116, %c0_117] : memref<4x4xf32, #tpu.memory_space<vmem>>, vector<4x4xf32>
    %cst_118 = arith.constant dense<0.000000e+00> : vector<4x256xf32>
    %331 = tpu.matmul %330, %329, %cst_118 {dimension_numbers = #tpu.dot_dimension_numbers<[1], [0], [0], [1], [0, 0, 1, 1], [], []>} : vector<4x4xf32>, vector<4x256xf32>, vector<4x256xf32> -> vector<4x256xf32>
    %332 = arith.addf %331, %1 : vector<4x256xf32>
    %c0_119 = arith.constant 0 : index
    %c0_120 = arith.constant 0 : index
    %c0_121 = arith.constant 0 : index
    %333 = vector.load %arg10[%c0_119, %c0_120, %c0_121] : memref<1x4x256xf32, #tpu.memory_space<vmem>>, vector<1x4x256xf32>
    %334 = vector.shape_cast %333 : vector<1x4x256xf32> to vector<4x256xf32>
    %335 = vector.shape_cast %332 : vector<4x256xf32> to vector<1x4x256xf32>
    tpu.vector_store %arg10[%c0_119, %c0_120, %c0_121], %335 {strides = array<i32>} : memref<1x4x256xf32, #tpu.memory_space<vmem>>, vector<1x4x256xf32>,
    return
  }
  func.func @transform_0(%arg0: i32) -> (i32, i32, i32) {
    %c0_i32 = arith.constant 0 : i32
    %c0_i32_0 = arith.constant 0 : i32
    %c0_i32_1 = arith.constant 0 : i32
    return %arg0, %c0_i32, %c0_i32_0 : i32, i32, i32
  }
  func.func @transform_1(%arg0: i32) -> (i32, i32) {
    %c0_i32 = arith.constant 0 : i32
    %c0_i32_0 = arith.constant 0 : i32
    %c0_i32_1 = arith.constant 0 : i32
    return %c0_i32, %c0_i32_0 : i32, i32
  }
  func.func @transform_2(%arg0: i32) -> (i32, i32) {
    %c0_i32 = arith.constant 0 : i32
    %c0_i32_0 = arith.constant 0 : i32
    %c0_i32_1 = arith.constant 0 : i32
    return %c0_i32, %c0_i32_0 : i32, i32
  }
  func.func @transform_3(%arg0: i32) -> (i32, i32) {
    %c0_i32 = arith.constant 0 : i32
    %c0_i32_0 = arith.constant 0 : i32
    %c0_i32_1 = arith.constant 0 : i32
    return %c0_i32, %c0_i32_0 : i32, i32
  }
  func.func @transform_4(%arg0: i32) -> (i32, i32) {
    %c0_i32 = arith.constant 0 : i32
    %c0_i32_0 = arith.constant 0 : i32
    %c0_i32_1 = arith.constant 0 : i32
    return %c0_i32, %c0_i32_0 : i32, i32
  }
  func.func @transform_5(%arg0: i32) -> (i32, i32) {
    %c0_i32 = arith.constant 0 : i32
    %c0_i32_0 = arith.constant 0 : i32
    %c0_i32_1 = arith.constant 0 : i32
    return %c0_i32, %c0_i32_0 : i32, i32
  }
  func.func @transform_6(%arg0: i32) -> (i32, i32) {
    %c0_i32 = arith.constant 0 : i32
    %c0_i32_0 = arith.constant 0 : i32
    %c0_i32_1 = arith.constant 0 : i32
    return %c0_i32, %c0_i32_0 : i32, i32
  }
  func.func @transform_7(%arg0: i32) -> (i32, i32) {
    %c0_i32 = arith.constant 0 : i32
    %c0_i32_0 = arith.constant 0 : i32
    %c0_i32_1 = arith.constant 0 : i32
    return %c0_i32, %c0_i32_0 : i32, i32
  }
  func.func @transform_8(%arg0: i32) -> (i32, i32, i32, i32) {
    %c0_i32 = arith.constant 0 : i32
    %c0_i32_0 = arith.constant 0 : i32
    %c0_i32_1 = arith.constant 0 : i32
    %c0_i32_2 = arith.constant 0 : i32
    %c0_i32_3 = arith.constant 0 : i32
    return %c0_i32, %c0_i32_0, %c0_i32_1, %c0_i32_2 : i32, i32, i32, i32
  }
  func.func @transform_9(%arg0: i32) -> (i32, i32, i32) {
    %c0_i32 = arith.constant 0 : i32
    %c0_i32_0 = arith.constant 0 : i32
    %c0_i32_1 = arith.constant 0 : i32
    return %arg0, %c0_i32, %c0_i32_0 : i32, i32, i32
  }
}

</mosaic_0001>

<llo_original>
// kernel: tpu_custom_call.1
$region0: #{tpu_custom_call.1}
  #allocation0 [shape = 'u32[]', space=smem, size = 0x4, offset = 0x4, fixed_abs, tag = 'smem constant byte address 0x4 - core index']
  #allocation1 [shape = 'u32[72,128]{1,0:T(1,128)}', space=vmem, size = 0x9000, scoped, tag = 'internal scratch']
  %s0 = inlined_call_operand.hbm [shape: f32[2,4,256], index: 0, kind: input, shape index: {}]
  %s1 = inlined_call_operand.hbm [shape: f32[4,4], index: 1, kind: input, shape index: {}]
  %s2 = inlined_call_operand.hbm [shape: f32[4,4], index: 2, kind: input, shape index: {}]
  %s3 = inlined_call_operand.hbm [shape: f32[4,36], index: 3, kind: input, shape index: {}]
  %s4 = inlined_call_operand.hbm [shape: f32[4,4], index: 4, kind: input, shape index: {}]
  %s5 = inlined_call_operand.vmem [shape: f32[4,4], index: 5, kind: input, shape index: {}]
  %s6 = inlined_call_operand.hbm [shape: f32[4,9], index: 6, kind: input, shape index: {}]
  %s7 = inlined_call_operand.hbm [shape: f32[4,4], index: 7, kind: input, shape index: {}]
  %s8 = inlined_call_operand.hbm [shape: f32[3,3,1,256], index: 8, kind: input, shape index: {}]
  %s9 = inlined_call_operand.hbm [shape: f32[2,4,256], index: 9, kind: output, shape index: {}]
  %s10 = sld [smem:[#allocation0]]
  $region101: #{tpu_custom_call.1} parent=0
    _
  %s12 = ssub.s32 1, %s10
  %s13 = scalar_select 0, %s12, %s10
  $region1: #{tpu_custom_call.1} parent=0
    #allocation2 [shape = 'u8[8192]{0}', space=vmem, size = 0x2000, scoped, tag = 'input window, operand 0']
    #allocation3 [shape = 's32[2]{0}', space=sflag, size = 0x8, scoped, tag = 'scoped memory for tpu_custom_call.1']
    #allocation4 [shape = 's32[2]{0}', space=sflag, size = 0x8, scoped, tag = 'scoped memory for tpu_custom_call.1']
    #allocation5 [shape = 'u8[2048]{0}', space=vmem, size = 0x800, scoped, tag = 'input window, operand 1, single buffered']
    #allocation6 [shape = 's32[1]{0}', space=sflag, size = 0x4, scoped, tag = 'scoped memory for tpu_custom_call.1']
    #allocation7 [shape = 'u8[2048]{0}', space=vmem, size = 0x800, scoped, tag = 'input window, operand 2, single buffered']
    #allocation8 [shape = 'u8[2048]{0}', space=vmem, size = 0x800, scoped, tag = 'input window, operand 3, single buffered']
    #allocation9 [shape = 's32[1]{0}', space=sflag, size = 0x4, scoped, tag = 'scoped memory for tpu_custom_call.1']
    #allocation10 [shape = 'u8[2048]{0}', space=vmem, size = 0x800, scoped, tag = 'input window, operand 4, single buffered']
    #allocation11 [shape = 'u8[2048]{0}', space=vmem, size = 0x800, scoped, tag = 'input window, operand 6, single buffered']
    #allocation12 [shape = 's32[1]{0}', space=sflag, size = 0x4, scoped, tag = 'scoped memory for tpu_custom_call.1']
    #allocation13 [shape = 'u8[2048]{0}', space=vmem, size = 0x800, scoped, tag = 'input window, operand 7, single buffered']
    #allocation14 [shape = 'u8[9216]{0}', space=vmem, size = 0x2400, scoped, tag = 'input window, operand 8, single buffered']
    #allocation15 [shape = 's32[1]{0}', space=sflag, size = 0x4, scoped, tag = 'scoped memory for tpu_custom_call.1']
    #allocation16 [shape = 'u8[8192]{0}', space=vmem, size = 0x2000, scoped, tag = 'output window, operand 0']
    %14 = vsyncpa [#allocation3], 0
    %s15 = scalar_lea.sflag [#allocation3], 1
    %16 = vsyncpa %s15, 0
    %17 = vsyncpa [#allocation6], 0
    %18 = vsyncpa [#allocation9], 0
    %19 = vsyncpa [#allocation12], 0
    %20 = vsyncpa [#allocation15], 0
    %21 = vsyncpa [#allocation4], 0
    %s22 = scalar_lea.sflag [#allocation4], 1
    %23 = vsyncpa %s22, 0
    loop: start=0, step=1, limit=4
    $region2: #{tpu_custom_call.1} parent=1 // loop_pre_header
      _
    $region3: #{tpu_custom_call.1} parent=1 // loop_header
      %s25 = sphi 0, %s29
      %p26 = scmp.ge.s32.totalorder %s25, 4
      %s35 = sphi 0, %s37
      %s38 = sphi 0, %s35
      %s39 = sphi 0, %s38
      %s55 = sphi 0, %s39
      %s59 = sphi 0, %s59
      %s61 = sphi 0, %s59
      %s62 = sphi 0, %s61
      %s76 = sphi 0, %s62
      %s80 = sphi 0, %s80
      %s82 = sphi 0, %s80
      %s83 = sphi 0, %s82
      %s97 = sphi 0, %s83
      %s101 = sphi 0, %s101
      %s103 = sphi 0, %s101
      %s104 = sphi 0, %s103
      %s118 = sphi 0, %s104
      %s122 = sphi 0, %s122
      %s124 = sphi 0, %s122
      %s125 = sphi 0, %s124
      %s139 = sphi 0, %s125
      %s143 = sphi 0, %s143
      %s145 = sphi 0, %s143
      %s146 = sphi 0, %s145
      %s160 = sphi 0, %s146
      %s164 = sphi 0, %s164
      %s166 = sphi 0, %s164
      %s167 = sphi 0, %s166
      %s181 = sphi 0, %s167
      %s185 = sphi 0, %s185
      %s187 = sphi 0, %s185
      %s188 = sphi 0, %s187
      %s202 = sphi 0, %s188
      %s206 = sphi 0, %s206
      %s208 = sphi 0, %s206
      %s209 = sphi 0, %s208
      %s223 = sphi 0, %s209
      %s229 = sphi 0, %s231
      %s232 = sphi 0, %s229
      %s233 = sphi 0, %s232
      %s249 = sphi 0, %s233
    $region4: #{tpu_custom_call.1} parent=1 // loop_header_branch
      %28 = sbr.rel (%p26) target = $region8
    $region5: #{tpu_custom_call.1} parent=1 // loop_body
      %s30 = ssub.s32 %s25, 1
      %s31 = ssub.s32 %s25, 2
      %s32 = sadd.s32 %s25, 1
      %s33 = ssub.s32 %s25, %s32
      %p34 = scmp.eq.s32.totalorder %s33, 0
      %s36 = sadd.s32 %s35, 1
      %s37 = scalar_select %p34, %s35, %s36
      %p40 = pneg %p34
      %p41 = scmp.eq.s32.totalorder %s25, 1
      %p42 = por %p40, %p41
      %p43 = scmp.ne.s32.totalorder %s35, %s38
      %p44 = scmp.eq.s32.totalorder %s25, 0
      %p45 = por %p43, %p44
      %p46 = scmp.ne.s32.totalorder %s35, %s38
      %p47 = scmp.eq.s32.totalorder %s30, 1
      %p48 = por %p46, %p47
      %p49 = scmp.ne.s32.totalorder %s38, %s39
      %p50 = scmp.eq.s32.totalorder %s30, 0
      %p51 = por %p49, %p50
      %p52 = scmp.ne.s32.totalorder %s38, %s39
      %p53 = scmp.eq.s32.totalorder %s31, 1
      %p54 = por %p52, %p53
      %p56 = scmp.ne.s32.totalorder %s39, %s55
      %p57 = scmp.eq.s32.totalorder %s31, 0
      %p58 = por %p56, %p57
      %s60 = sadd.s32 %s59, 1
      %p63 = scmp.eq.s32.totalorder %s25, 1
      %p64 = scmp.ne.s32.totalorder %s59, %s61
      %p65 = scmp.eq.s32.totalorder %s25, 0
      %p66 = por %p64, %p65
      %p67 = scmp.ne.s32.totalorder %s59, %s61
      %p68 = scmp.eq.s32.totalorder %s30, 1
      %p69 = por %p67, %p68
      %p70 = scmp.ne.s32.totalorder %s61, %s62
      %p71 = scmp.eq.s32.totalorder %s30, 0
      %p72 = por %p70, %p71
      %p73 = scmp.ne.s32.totalorder %s61, %s62
      %p74 = scmp.eq.s32.totalorder %s31, 1
      %p75 = por %p73, %p74
      %p77 = scmp.ne.s32.totalorder %s62, %s76
      %p78 = scmp.eq.s32.totalorder %s31, 0
      %p79 = por %p77, %p78
      %s81 = sadd.s32 %s80, 1
      %p84 = scmp.eq.s32.totalorder %s25, 1
      %p85 = scmp.ne.s32.totalorder %s80, %s82
      %p86 = scmp.eq.s32.totalorder %s25, 0
      %p87 = por %p85, %p86
      %p88 = scmp.ne.s32.totalorder %s80, %s82
      %p89 = scmp.eq.s32.totalorder %s30, 1
      %p90 = por %p88, %p89
      %p91 = scmp.ne.s32.totalorder %s82, %s83
      %p92 = scmp.eq.s32.totalorder %s30, 0
      %p93 = por %p91, %p92
      %p94 = scmp.ne.s32.totalorder %s82, %s83
      %p95 = scmp.eq.s32.totalorder %s31, 1
      %p96 = por %p94, %p95
      %p98 = scmp.ne.s32.totalorder %s83, %s97
      %p99 = scmp.eq.s32.totalorder %s31, 0
      %p100 = por %p98, %p99
      %s102 = sadd.s32 %s101, 1
      %p105 = scmp.eq.s32.totalorder %s25, 1
      %p106 = scmp.ne.s32.totalorder %s101, %s103
      %p107 = scmp.eq.s32.totalorder %s25, 0
      %p108 = por %p106, %p107
      %p109 = scmp.ne.s32.totalorder %s101, %s103
      %p110 = scmp.eq.s32.totalorder %s30, 1
      %p111 = por %p109, %p110
      %p112 = scmp.ne.s32.totalorder %s103, %s104
      %p113 = scmp.eq.s32.totalorder %s30, 0
      %p114 = por %p112, %p113
      %p115 = scmp.ne.s32.totalorder %s103, %s104
      %p116 = scmp.eq.s32.totalorder %s31, 1
      %p117 = por %p115, %p116
      %p119 = scmp.ne.s32.totalorder %s104, %s118
      %p120 = scmp.eq.s32.totalorder %s31, 0
      %p121 = por %p119, %p120
      %s123 = sadd.s32 %s122, 1
      %p126 = scmp.eq.s32.totalorder %s25, 1
      %p127 = scmp.ne.s32.totalorder %s122, %s124
      %p128 = scmp.eq.s32.totalorder %s25, 0
      %p129 = por %p127, %p128
      %p130 = scmp.ne.s32.totalorder %s122, %s124
      %p131 = scmp.eq.s32.totalorder %s30, 1
      %p132 = por %p130, %p131
      %p133 = scmp.ne.s32.totalorder %s124, %s125
      %p134 = scmp.eq.s32.totalorder %s30, 0
      %p135 = por %p133, %p134
      %p136 = scmp.ne.s32.totalorder %s124, %s125
      %p137 = scmp.eq.s32.totalorder %s31, 1
      %p138 = por %p136, %p137
      %p140 = scmp.ne.s32.totalorder %s125, %s139
      %p141 = scmp.eq.s32.totalorder %s31, 0
      %p142 = por %p140, %p141
      %s144 = sadd.s32 %s143, 1
      %p147 = scmp.eq.s32.totalorder %s25, 1
      %p148 = scmp.ne.s32.totalorder %s143, %s145
      %p149 = scmp.eq.s32.totalorder %s25, 0
      %p150 = por %p148, %p149
      %p151 = scmp.ne.s32.totalorder %s143, %s145
      %p152 = scmp.eq.s32.totalorder %s30, 1
      %p153 = por %p151, %p152
      %p154 = scmp.ne.s32.totalorder %s145, %s146
      %p155 = scmp.eq.s32.totalorder %s30, 0
      %p156 = por %p154, %p155
      %p157 = scmp.ne.s32.totalorder %s145, %s146
      %p158 = scmp.eq.s32.totalorder %s31, 1
      %p159 = por %p157, %p158
      %p161 = scmp.ne.s32.totalorder %s146, %s160
      %p162 = scmp.eq.s32.totalorder %s31, 0
      %p163 = por %p161, %p162
      %s165 = sadd.s32 %s164, 1
      %p168 = scmp.eq.s32.totalorder %s25, 1
      %p169 = scmp.ne.s32.totalorder %s164, %s166
      %p170 = scmp.eq.s32.totalorder %s25, 0
      %p171 = por %p169, %p170
      %p172 = scmp.ne.s32.totalorder %s164, %s166
      %p173 = scmp.eq.s32.totalorder %s30, 1
      %p174 = por %p172, %p173
      %p175 = scmp.ne.s32.totalorder %s166, %s167
      %p176 = scmp.eq.s32.totalorder %s30, 0
      %p177 = por %p175, %p176
      %p178 = scmp.ne.s32.totalorder %s166, %s167
      %p179 = scmp.eq.s32.totalorder %s31, 1
      %p180 = por %p178, %p179
      %p182 = scmp.ne.s32.totalorder %s167, %s181
      %p183 = scmp.eq.s32.totalorder %s31, 0
      %p184 = por %p182, %p183
      %s186 = sadd.s32 %s185, 1
      %p189 = scmp.eq.s32.totalorder %s25, 1
      %p190 = scmp.ne.s32.totalorder %s185, %s187
      %p191 = scmp.eq.s32.totalorder %s25, 0
      %p192 = por %p190, %p191
      %p193 = scmp.ne.s32.totalorder %s185, %s187
      %p194 = scmp.eq.s32.totalorder %s30, 1
      %p195 = por %p193, %p194
      %p196 = scmp.ne.s32.totalorder %s187, %s188
      %p197 = scmp.eq.s32.totalorder %s30, 0
      %p198 = por %p196, %p197
      %p199 = scmp.ne.s32.totalorder %s187, %s188
      %p200 = scmp.eq.s32.totalorder %s31, 1
      %p201 = por %p199, %p200
      %p203 = scmp.ne.s32.totalorder %s188, %s202
      %p204 = scmp.eq.s32.totalorder %s31, 0
      %p205 = por %p203, %p204
      %s207 = sadd.s32 %s206, 1
      %p210 = scmp.eq.s32.totalorder %s25, 1
      %p211 = scmp.ne.s32.totalorder %s206, %s208
      %p212 = scmp.eq.s32.totalorder %s25, 0
      %p213 = por %p211, %p212
      %p214 = scmp.ne.s32.totalorder %s206, %s208
      %p215 = scmp.eq.s32.totalorder %s30, 1
      %p216 = por %p214, %p215
      %p217 = scmp.ne.s32.totalorder %s208, %s209
      %p218 = scmp.eq.s32.totalorder %s30, 0
      %p219 = por %p217, %p218
      %p220 = scmp.ne.s32.totalorder %s208, %s209
      %p221 = scmp.eq.s32.totalorder %s31, 1
      %p222 = por %p220, %p221
      %p224 = scmp.ne.s32.totalorder %s209, %s223
      %p225 = scmp.eq.s32.totalorder %s31, 0
      %p226 = por %p224, %p225
      %s227 = ssub.s32 %s25, %s32
      %p228 = scmp.eq.s32.totalorder %s227, 0
      %s230 = sadd.s32 %s229, 1
      %s231 = scalar_select %p228, %s229, %s230
      %p234 = pneg %p228
      %p235 = scmp.eq.s32.totalorder %s25, 1
      %p236 = por %p234, %p235
      %p237 = scmp.ne.s32.totalorder %s229, %s232
      %p238 = scmp.eq.s32.totalorder %s25, 0
      %p239 = por %p237, %p238
      %p240 = scmp.ne.s32.totalorder %s229, %s232
      %p241 = scmp.eq.s32.totalorder %s30, 1
      %p242 = por %p240, %p241
      %p243 = scmp.ne.s32.totalorder %s232, %s233
      %p244 = scmp.eq.s32.totalorder %s30, 0
      %p245 = por %p243, %p244
      %p246 = scmp.ne.s32.totalorder %s232, %s233
      %p247 = scmp.eq.s32.totalorder %s31, 1
      %p248 = por %p246, %p247
      %p250 = scmp.ne.s32.totalorder %s233, %s249
      %p251 = scmp.eq.s32.totalorder %s31, 0
      %p252 = por %p250, %p251
      %p253 = scmp.le.s32.totalorder 1, %s25
      %p254 = scmp.lt.s32.totalorder %s25, 3
      %p255 = pnand %p253, %p254
      %p256 = pneg %p255
      // Predicated region
      $region9: #{tpu_custom_call.1} parent=5 // pred_check
        _
      $region10: #{tpu_custom_call.1} parent=5 // pred_check_branch
        %258 = sbr.rel (%p255) target = $region12
      $region11: #{tpu_custom_call.1} parent=5 // pred_region
        %s259 = ssub.s32 %s25, 1
        // Predicated region
        $region13: #{tpu_custom_call.1} parent=11 // pred_check
          %p260 = pneg %p72
        $region14: #{tpu_custom_call.1} parent=11 // pred_check_branch
          %262 = sbr.rel (%p260) target = $region16
        $region15: #{tpu_custom_call.1} parent=11 // pred_region
          %264 = vsyncadd [#allocation6], 0
          %s266 = sshll.u32 %s1, 4
          %s267 = int_to_ptr.hbm [resolvable:$true] %s266
          %s268 = sshll.u32 [#allocation5], 4
          %s269 = int_to_ptr.vmem [resolvable:$true] %s268
          %271 = dma.hbm_to_vmem [thread:$0]  %s267, 64, %s269, [#allocation6]
        $region16: #{tpu_custom_call.1} parent=11 // pred_fallthru
          _
        // Predicated region
        $region17: #{tpu_custom_call.1} parent=11 // pred_check
          %p272 = pneg %p93
        $region18: #{tpu_custom_call.1} parent=11 // pred_check_branch
          %274 = sbr.rel (%p272) target = $region20
        $region19: #{tpu_custom_call.1} parent=11 // pred_region
          %276 = vsyncadd [#allocation6], 0
          %s278 = sshll.u32 %s2, 4
          %s279 = int_to_ptr.hbm [resolvable:$true] %s278
          %s280 = sshll.u32 [#allocation7], 4
          %s281 = int_to_ptr.vmem [resolvable:$true] %s280
          %283 = dma.hbm_to_vmem [thread:$0]  %s279, 64, %s281, [#allocation6]
        $region20: #{tpu_custom_call.1} parent=11 // pred_fallthru
          _
        // Predicated region
        $region21: #{tpu_custom_call.1} parent=11 // pred_check
          %p284 = pneg %p114
        $region22: #{tpu_custom_call.1} parent=11 // pred_check_branch
          %286 = sbr.rel (%p284) target = $region24
        $region23: #{tpu_custom_call.1} parent=11 // pred_region
          %288 = vsyncadd [#allocation9], 0
          %s290 = sshll.u32 %s3, 4
          %s291 = int_to_ptr.hbm [resolvable:$true] %s290
          %s292 = sshll.u32 [#allocation8], 4
          %s293 = int_to_ptr.vmem [resolvable:$true] %s292
          %295 = dma.hbm_to_vmem [thread:$0]  %s291, 64, %s293, [#allocation9]
        $region24: #{tpu_custom_call.1} parent=11 // pred_fallthru
          _
        // Predicated region
        $region25: #{tpu_custom_call.1} parent=11 // pred_check
          %p296 = pneg %p135
        $region26: #{tpu_custom_call.1} parent=11 // pred_check_branch
          %298 = sbr.rel (%p296) target = $region28
        $region27: #{tpu_custom_call.1} parent=11 // pred_region
          %300 = vsyncadd [#allocation9], 0
          %s302 = sshll.u32 %s4, 4
          %s303 = int_to_ptr.hbm [resolvable:$true] %s302
          %s304 = sshll.u32 [#allocation10], 4
          %s305 = int_to_ptr.vmem [resolvable:$true] %s304
          %307 = dma.hbm_to_vmem [thread:$0]  %s303, 64, %s305, [#allocation9]
        $region28: #{tpu_custom_call.1} parent=11 // pred_fallthru
          _
        // Predicated region
        $region29: #{tpu_custom_call.1} parent=11 // pred_check
          %p308 = pneg %p156
        $region30: #{tpu_custom_call.1} parent=11 // pred_check_branch
          %310 = sbr.rel (%p308) target = $region32
        $region31: #{tpu_custom_call.1} parent=11 // pred_region
          _
        $region32: #{tpu_custom_call.1} parent=11 // pred_fallthru
          _
        // Predicated region
        $region33: #{tpu_custom_call.1} parent=11 // pred_check
          %p311 = pneg %p177
        $region34: #{tpu_custom_call.1} parent=11 // pred_check_branch
          %313 = sbr.rel (%p311) target = $region36
        $region35: #{tpu_custom_call.1} parent=11 // pred_region
          %315 = vsyncadd [#allocation12], 0
          %s317 = sshll.u32 %s6, 4
          %s318 = int_to_ptr.hbm [resolvable:$true] %s317
          %s319 = sshll.u32 [#allocation11], 4
          %s320 = int_to_ptr.vmem [resolvable:$true] %s319
          %322 = dma.hbm_to_vmem [thread:$0]  %s318, 64, %s320, [#allocation12]
        $region36: #{tpu_custom_call.1} parent=11 // pred_fallthru
          _
        // Predicated region
        $region37: #{tpu_custom_call.1} parent=11 // pred_check
          %p323 = pneg %p198
        $region38: #{tpu_custom_call.1} parent=11 // pred_check_branch
          %325 = sbr.rel (%p323) target = $region40
        $region39: #{tpu_custom_call.1} parent=11 // pred_region
          %327 = vsyncadd [#allocation12], 0
          %s329 = sshll.u32 %s7, 4
          %s330 = int_to_ptr.hbm [resolvable:$true] %s329
          %s331 = sshll.u32 [#allocation13], 4
          %s332 = int_to_ptr.vmem [resolvable:$true] %s331
          %334 = dma.hbm_to_vmem [thread:$0]  %s330, 64, %s332, [#allocation12]
        $region40: #{tpu_custom_call.1} parent=11 // pred_fallthru
          _
        // Predicated region
        $region41: #{tpu_custom_call.1} parent=11 // pred_check
          %p335 = pneg %p219
        $region42: #{tpu_custom_call.1} parent=11 // pred_check_branch
          %337 = sbr.rel (%p335) target = $region44
        $region43: #{tpu_custom_call.1} parent=11 // pred_region
          %339 = vsyncadd [#allocation15], 0
          %s340 = sshll.u32 %s8, 4
          %s341 = int_to_ptr.hbm [resolvable:$true] %s340
          %s342 = sshll.u32 [#allocation14], 4
          %s343 = int_to_ptr.vmem [resolvable:$true] %s342
          %348 = dma.hbm_to_vmem [thread:$0]  %s341, 288, %s343, [#allocation15], 32, 32, 2
        $region44: #{tpu_custom_call.1} parent=11 // pred_fallthru
          _
      $region12: #{tpu_custom_call.1} parent=5 // pred_fallthru
        _
      %p349 = scmp.lt.s32.totalorder %s25, 2
      // Predicated region
      $region45: #{tpu_custom_call.1} parent=5 // pred_check
        %p350 = pneg %p349
      $region46: #{tpu_custom_call.1} parent=5 // pred_check_branch
        %352 = sbr.rel (%p350) target = $region48
      $region47: #{tpu_custom_call.1} parent=5 // pred_region
        // Predicated region
        $region49: #{tpu_custom_call.1} parent=47 // pred_check
          %p353 = pneg %p45
        $region50: #{tpu_custom_call.1} parent=47 // pred_check_branch
          %355 = sbr.rel (%p353) target = $region52
        $region51: #{tpu_custom_call.1} parent=47 // pred_region
          %s356 = sand.u32 %s35, 1
          %s357 = scalar_lea.sflag [#allocation3], %s356
          %s358 = sand.u32 %s35, 1
          %s359 = smul.addr %s358, 8
          %s360 = scalar_lea.vmem [#allocation2], %s359
          %362 = vsyncadd %s357, 0
          %s363 = smul.addr %s25, 2
          %s364 = smul.addr %s363, 4
          %s365 = scalar_lea.hbm %s0, %s364
          %s367 = sshll.u32 %s365, 4
          %s368 = int_to_ptr.hbm [resolvable:$true] %s367
          %s369 = sshll.u32 %s360, 4
          %s370 = int_to_ptr.vmem [resolvable:$true] %s369
          %372 = dma.hbm_to_vmem [thread:$0]  %s368, 128, %s370, %s357
        $region52: #{tpu_custom_call.1} parent=47 // pred_fallthru
          _
      $region48: #{tpu_custom_call.1} parent=5 // pred_fallthru
        _
      %p373 = scmp.le.s32.totalorder 1, %s25
      %p374 = scmp.lt.s32.totalorder %s25, 3
      %p375 = pnand %p373, %p374
      %p376 = pneg %p375
      // Predicated region
      $region53: #{tpu_custom_call.1} parent=5 // pred_check
        _
      $region54: #{tpu_custom_call.1} parent=5 // pred_check_branch
        %378 = sbr.rel (%p375) target = $region56
      $region55: #{tpu_custom_call.1} parent=5 // pred_region
        %s379 = ssub.s32 %s25, 1
        %s380 = sand.u32 %s38, 1
        %s381 = scalar_lea.sflag [#allocation3], %s380
        %s382 = sand.u32 %s38, 1
        %s383 = smul.addr %s382, 8
        %s384 = scalar_lea.vmem [#allocation2], %s383
        // Predicated region
        $region57: #{tpu_custom_call.1} parent=55 // pred_check
          %p385 = pneg %p51
        $region58: #{tpu_custom_call.1} parent=55 // pred_check_branch
          %387 = sbr.rel (%p385) target = $region60
        $region59: #{tpu_custom_call.1} parent=55 // pred_region
          %389 = dma.done %s381, 128
        $region60: #{tpu_custom_call.1} parent=55 // pred_fallthru
          _
        // Predicated region
        $region61: #{tpu_custom_call.1} parent=55 // pred_check
          %p390 = pneg %p72
        $region62: #{tpu_custom_call.1} parent=55 // pred_check_branch
          %392 = sbr.rel (%p390) target = $region64
        $region63: #{tpu_custom_call.1} parent=55 // pred_region
          %394 = dma.done [#allocation6], 64
        $region64: #{tpu_custom_call.1} parent=55 // pred_fallthru
          _
        // Predicated region
        $region65: #{tpu_custom_call.1} parent=55 // pred_check
          %p395 = pneg %p93
        $region66: #{tpu_custom_call.1} parent=55 // pred_check_branch
          %397 = sbr.rel (%p395) target = $region68
        $region67: #{tpu_custom_call.1} parent=55 // pred_region
          %399 = dma.done [#allocation6], 64
        $region68: #{tpu_custom_call.1} parent=55 // pred_fallthru
          _
        // Predicated region
        $region69: #{tpu_custom_call.1} parent=55 // pred_check
          %p400 = pneg %p114
        $region70: #{tpu_custom_call.1} parent=55 // pred_check_branch
          %402 = sbr.rel (%p400) target = $region72
        $region71: #{tpu_custom_call.1} parent=55 // pred_region
          %404 = dma.done [#allocation9], 64
        $region72: #{tpu_custom_call.1} parent=55 // pred_fallthru
          _
        // Predicated region
        $region73: #{tpu_custom_call.1} parent=55 // pred_check
          %p405 = pneg %p135
        $region74: #{tpu_custom_call.1} parent=55 // pred_check_branch
          %407 = sbr.rel (%p405) target = $region76
        $region75: #{tpu_custom_call.1} parent=55 // pred_region
          %409 = dma.done [#allocation9], 64
        $region76: #{tpu_custom_call.1} parent=55 // pred_fallthru
          _
        // Predicated region
        $region77: #{tpu_custom_call.1} parent=55 // pred_check
          %p410 = pneg %p177
        $region78: #{tpu_custom_call.1} parent=55 // pred_check_branch
          %412 = sbr.rel (%p410) target = $region80
        $region79: #{tpu_custom_call.1} parent=55 // pred_region
          %414 = dma.done [#allocation12], 64
        $region80: #{tpu_custom_call.1} parent=55 // pred_fallthru
          _
        // Predicated region
        $region81: #{tpu_custom_call.1} parent=55 // pred_check
          %p415 = pneg %p198
        $region82: #{tpu_custom_call.1} parent=55 // pred_check_branch
          %417 = sbr.rel (%p415) target = $region84
        $region83: #{tpu_custom_call.1} parent=55 // pred_region
          %419 = dma.done [#allocation12], 64
        $region84: #{tpu_custom_call.1} parent=55 // pred_fallthru
          _
        // Predicated region
        $region85: #{tpu_custom_call.1} parent=55 // pred_check
          %p420 = pneg %p219
        $region86: #{tpu_custom_call.1} parent=55 // pred_check_branch
          %422 = sbr.rel (%p420) target = $region88
        $region87: #{tpu_custom_call.1} parent=55 // pred_region
          %424 = dma.done [#allocation15], 288
        $region88: #{tpu_custom_call.1} parent=55 // pred_fallthru
          _
        %s425 = sand.u32 %s38, 1
        %s426 = scalar_lea.sflag [#allocation3], %s425
        %s427 = sand.u32 %s38, 1
        %s428 = smul.addr %s427, 8
        %s429 = scalar_lea.vmem [#allocation2], %s428
        %p430 = pneg %p51
        %p431 = pneg %p48
        %p432 = pneg %p72
        %p433 = pneg %p69
        %p434 = pneg %p93
        %p435 = pneg %p90
        %p436 = pneg %p114
        %p437 = pneg %p111
        %p438 = pneg %p135
        %p439 = pneg %p132
        %p440 = pneg %p156
        %p441 = pneg %p153
        %p442 = pneg %p177
        %p443 = pneg %p174
        %p444 = pneg %p198
        %p445 = pneg %p195
        %p446 = pneg %p219
        %p447 = pneg %p216
        %p448 = pneg %p245
        %p449 = pneg %p242
        %s450 = sand.u32 %s232, 1
        %s451 = scalar_lea.sflag [#allocation4], %s450
        %s452 = sand.u32 %s232, 1
        %s453 = smul.addr %s452, 8
        %s454 = scalar_lea.vmem [#allocation16], %s453
        %v455 = vld [vmem:[%s384] sm:$0xff]
        %v456 = vld [vmem:[#allocation5] sm:$0xf]
        %458 = vst [vmem:[#allocation1] ss:$2 sm:$0xff] %v455
        %v459 = vld.sshfl [vmem:[#allocation1] sm:$0xff pattern:$0x75316420]
        %v460 = vld.sshfl [vmem:[#allocation1 + $0x8] sm:$0xff pattern:$0x75316420]
        %vm461 = vcmask 31744
        %v463 = vsel %vm461, %v456, 0
        %vm465 = vcmask 1043456
        %v466 = vsel %vm465, %v459, 0
        %v468 = vsel %vm465, %v460, 0
        %470 = vmatpush.msra.mxu0 0.0
        %471 = vmatpush.msra.mxu0 0.0
        %472 = vmatpush.msra.mxu0 0.0
        %473 = vmatpush.msra.mxu0 0.0
        %474 = vmatpush.msra.mxu0 0.0
        %475 = vmatpush.msra.mxu0 0.0
        %476 = vmatpush.msra.mxu0 0.0
        %477 = vmatpush.msra.mxu0 0.0
        %478 = vmatpush.msra.mxu0 0.0
        %479 = vmatpush.msra.mxu0 0.0
        %480 = vmatpush.msra.mxu0 0.0
        %481 = vmatpush.msra.mxu0 0.0
        %482 = vmatpush.msra.mxu0 0.0
        %483 = vmatpush.msra.mxu0 0.0
        %484 = vmatpush.msra.mxu0 0.0
        %485 = vmatpush.msra.mxu0 %v466
        %486 = vmatmul.f32.gmra.mxu0 %v463
        %v487 = vpop.f32.mrf.mxu0
        %v488 = vadd.f32 0.0, %v487
        %489 = vdwg.mxu0
        %490 = vmatpush.msra.mxu0 0.0
        %491 = vmatpush.msra.mxu0 0.0
        %492 = vmatpush.msra.mxu0 0.0
        %493 = vmatpush.msra.mxu0 0.0
        %494 = vmatpush.msra.mxu0 0.0
        %495 = vmatpush.msra.mxu0 0.0
        %496 = vmatpush.msra.mxu0 0.0
        %497 = vmatpush.msra.mxu0 0.0
        %498 = vmatpush.msra.mxu0 0.0
        %499 = vmatpush.msra.mxu0 0.0
        %500 = vmatpush.msra.mxu0 0.0
        %501 = vmatpush.msra.mxu0 0.0
        %502 = vmatpush.msra.mxu0 0.0
        %503 = vmatpush.msra.mxu0 0.0
        %504 = vmatpush.msra.mxu0 0.0
        %505 = vmatpush.msra.mxu0 %v468
        %506 = vmatmul.f32.gmra.mxu0 %v463
        %v507 = vpop.f32.mrf.mxu0
        %v508 = vadd.f32 0.0, %v507
        %509 = vdwg.mxu0
        %v510 = vmax.f32 %v488, 0.0
        %v511 = vmax.f32 %v508, 0.0
        %v512 = vmin.f32 %v510, 6.0
        %v513 = vmin.f32 %v511, 6.0
        %v514 = vld [vmem:[#allocation7] sm:$0xf]
        %515 = vst [vmem:[#allocation1] ss:$2 sm:$0xff] %v455
        %v516 = vld.sshfl [vmem:[#allocation1] sm:$0xff pattern:$0x75316420]
        %v517 = vld.sshfl [vmem:[#allocation1 + $0x8] sm:$0xff pattern:$0x75316420]
        %v519 = vsel %vm461, %v514, 0
        %v521 = vsel %vm465, %v516, 0
        %v523 = vsel %vm465, %v517, 0
        %525 = vmatpush.msra.mxu0 0.0
        %526 = vmatpush.msra.mxu0 0.0
        %527 = vmatpush.msra.mxu0 0.0
        %528 = vmatpush.msra.mxu0 0.0
        %529 = vmatpush.msra.mxu0 0.0
        %530 = vmatpush.msra.mxu0 0.0
        %531 = vmatpush.msra.mxu0 0.0
        %532 = vmatpush.msra.mxu0 0.0
        %533 = vmatpush.msra.mxu0 0.0
        %534 = vmatpush.msra.mxu0 0.0
        %535 = vmatpush.msra.mxu0 0.0
        %536 = vmatpush.msra.mxu0 0.0
        %537 = vmatpush.msra.mxu0 0.0
        %538 = vmatpush.msra.mxu0 0.0
        %539 = vmatpush.msra.mxu0 0.0
        %540 = vmatpush.msra.mxu0 %v521
        %541 = vmatmul.f32.gmra.mxu0 %v519
        %v542 = vpop.f32.mrf.mxu0
        %v543 = vadd.f32 0.0, %v542
        %544 = vdwg.mxu0
        %545 = vmatpush.msra.mxu0 0.0
        %546 = vmatpush.msra.mxu0 0.0
        %547 = vmatpush.msra.mxu0 0.0
        %548 = vmatpush.msra.mxu0 0.0
        %549 = vmatpush.msra.mxu0 0.0
        %550 = vmatpush.msra.mxu0 0.0
        %551 = vmatpush.msra.mxu0 0.0
        %552 = vmatpush.msra.mxu0 0.0
        %553 = vmatpush.msra.mxu0 0.0
        %554 = vmatpush.msra.mxu0 0.0
        %555 = vmatpush.msra.mxu0 0.0
        %556 = vmatpush.msra.mxu0 0.0
        %557 = vmatpush.msra.mxu0 0.0
        %558 = vmatpush.msra.mxu0 0.0
        %559 = vmatpush.msra.mxu0 0.0
        %560 = vmatpush.msra.mxu0 %v523
        %561 = vmatmul.f32.gmra.mxu0 %v519
        %v562 = vpop.f32.mrf.mxu0
        %v563 = vadd.f32 0.0, %v562
        %564 = vdwg.mxu0
        %v565 = vmax.f32 %v543, 0.0
        %v566 = vmax.f32 %v563, 0.0
        %v567 = vmin.f32 %v565, 6.0
        %v568 = vmin.f32 %v566, 6.0
        %v569 = vld [vmem:[#allocation8] sm:$0xf]
        %v570 = vld [vmem:[#allocation14] sm:$0x3]
        %571 = vrot.lane.b32.xlu0 %v512, 34
        %v572 = vpop.permute.xlu0 %571
        %573 = vrot.lane.b32.xlu0 %v513, 34
        %v574 = vpop.permute.xlu0 %573
        %v575 = vlaneseq
        %v576 = vand.u32 %v575, 127
        %vm577 = vcmp.lt.s32.totalorder %v576, 34
        %v578 = vsel %vm577, %v572, %v574
        %v579 = vsel %vm577, %v574, %v572
        %v581 = vperm.slane %v570, 0
        %v582 = vperm.slane %v570, 1
        %v585 = vmul.f32 %v579, %v581
        %v586 = vmul.f32 %v578, %v582
        %587 = vrot.lane.b32.xlu0 %v567, 34
        %v588 = vpop.permute.xlu0 %587
        %589 = vrot.lane.b32.xlu0 %v568, 34
        %v590 = vpop.permute.xlu0 %589
        %v591 = vsel %vm577, %v588, %v590
        %v592 = vsel %vm577, %v590, %v588
        %v593 = vmul.f32 %v592, %v581
        %v594 = vmul.f32 %v591, %v582
        %596 = vset.pattern.permute.xlu0 0
        %597 = vperm.xlu0 %596, %v569
        %v598 = vpop.permute.xlu0 %597
        %v600 = vmul.f32 %v598, %v585
        %v601 = vmul.f32 %v598, %v586
        %v602 = vadd.f32 %v600, 0.0
        %v603 = vadd.f32 %v601, 0.0
        %604 = vset.pattern.permute.xlu0 1
        %605 = vperm.xlu0 %604, %v569
        %v606 = vpop.permute.xlu0 %605
        %v608 = vmul.f32 %v606, %v593
        %v609 = vmul.f32 %v606, %v594
        %v610 = vadd.f32 %v602, %v608
        %v611 = vadd.f32 %v603, %v609
        %612 = vset.pattern.permute.xlu0 2
        %613 = vperm.xlu0 %612, %v569
        %v614 = vpop.permute.xlu0 %613
        %v616 = vmul.f32 %v614, %v585
        %v617 = vmul.f32 %v614, %v586
        %v618 = vadd.f32 %v616, 0.0
        %v619 = vadd.f32 %v617, 0.0
        %620 = vset.pattern.permute.xlu0 3
        %621 = vperm.xlu0 %620, %v569
        %v622 = vpop.permute.xlu0 %621
        %v624 = vmul.f32 %v622, %v593
        %v625 = vmul.f32 %v622, %v594
        %v626 = vadd.f32 %v618, %v624
        %v627 = vadd.f32 %v619, %v625
        %s628 = scalar_lea.vmem [#allocation14], 2
        %v629 = vld [vmem:[%s628] sm:$0x3]
        %630 = vrot.lane.b32.xlu0 %v512, 32
        %v631 = vpop.permute.xlu0 %630
        %632 = vrot.lane.b32.xlu0 %v513, 32
        %v633 = vpop.permute.xlu0 %632
        %vm634 = vcmp.lt.s32.totalorder %v576, 32
        %v635 = vsel %vm634, %v631, %v633
        %v636 = vsel %vm634, %v633, %v631
        %v638 = vperm.slane %v629, 0
        %v639 = vperm.slane %v629, 1
        %v642 = vmul.f32 %v636, %v638
        %v643 = vmul.f32 %v635, %v639
        %644 = vrot.lane.b32.xlu0 %v567, 32
        %v645 = vpop.permute.xlu0 %644
        %646 = vrot.lane.b32.xlu0 %v568, 32
        %v647 = vpop.permute.xlu0 %646
        %v648 = vsel %vm634, %v645, %v647
        %v649 = vsel %vm634, %v647, %v645
        %v650 = vmul.f32 %v649, %v638
        %v651 = vmul.f32 %v648, %v639
        %652 = vset.pattern.permute.xlu0 4
        %653 = vperm.xlu0 %652, %v569
        %v654 = vpop.permute.xlu0 %653
        %v656 = vmul.f32 %v654, %v642
        %v657 = vmul.f32 %v654, %v643
        %v658 = vadd.f32 %v610, %v656
        %v659 = vadd.f32 %v611, %v657
        %660 = vset.pattern.permute.xlu0 5
        %661 = vperm.xlu0 %660, %v569
        %v662 = vpop.permute.xlu0 %661
        %v664 = vmul.f32 %v662, %v650
        %v665 = vmul.f32 %v662, %v651
        %v666 = vadd.f32 %v658, %v664
        %v667 = vadd.f32 %v659, %v665
        %668 = vset.pattern.permute.xlu0 6
        %669 = vperm.xlu0 %668, %v569
        %v670 = vpop.permute.xlu0 %669
        %v672 = vmul.f32 %v670, %v642
        %v673 = vmul.f32 %v670, %v643
        %v674 = vadd.f32 %v626, %v672
        %v675 = vadd.f32 %v627, %v673
        %676 = vset.pattern.permute.xlu0 7
        %677 = vperm.xlu0 %676, %v569
        %v678 = vpop.permute.xlu0 %677
        %v680 = vmul.f32 %v678, %v650
        %v681 = vmul.f32 %v678, %v651
        %v682 = vadd.f32 %v674, %v680
        %v683 = vadd.f32 %v675, %v681
        %s684 = scalar_lea.vmem [#allocation14], 4
        %v685 = vld [vmem:[%s684] sm:$0x3]
        %686 = vrot.lane.b32.xlu0 %v512, 30
        %v687 = vpop.permute.xlu0 %686
        %688 = vrot.lane.b32.xlu0 %v513, 30
        %v689 = vpop.permute.xlu0 %688
        %vm690 = vcmp.lt.s32.totalorder %v576, 30
        %v691 = vsel %vm690, %v687, %v689
        %v692 = vsel %vm690, %v689, %v687
        %v694 = vperm.slane %v685, 0
        %v695 = vperm.slane %v685, 1
        %v698 = vmul.f32 %v692, %v694
        %v699 = vmul.f32 %v691, %v695
        %700 = vrot.lane.b32.xlu0 %v567, 30
        %v701 = vpop.permute.xlu0 %700
        %702 = vrot.lane.b32.xlu0 %v568, 30
        %v703 = vpop.permute.xlu0 %702
        %v704 = vsel %vm690, %v701, %v703
        %v705 = vsel %vm690, %v703, %v701
        %v706 = vmul.f32 %v705, %v694
        %v707 = vmul.f32 %v704, %v695
        %708 = vset.pattern.permute.xlu0 8
        %709 = vperm.xlu0 %708, %v569
        %v710 = vpop.permute.xlu0 %709
        %v712 = vmul.f32 %v710, %v698
        %v713 = vmul.f32 %v710, %v699
        %v714 = vadd.f32 %v666, %v712
        %v715 = vadd.f32 %v667, %v713
        %716 = vset.pattern.permute.xlu0 9
        %717 = vperm.xlu0 %716, %v569
        %v718 = vpop.permute.xlu0 %717
        %v720 = vmul.f32 %v718, %v706
        %v721 = vmul.f32 %v718, %v707
        %v722 = vadd.f32 %v714, %v720
        %v723 = vadd.f32 %v715, %v721
        %724 = vset.pattern.permute.xlu0 10
        %725 = vperm.xlu0 %724, %v569
        %v726 = vpop.permute.xlu0 %725
        %v728 = vmul.f32 %v726, %v698
        %v729 = vmul.f32 %v726, %v699
        %v730 = vadd.f32 %v682, %v728
        %v731 = vadd.f32 %v683, %v729
        %732 = vset.pattern.permute.xlu0 11
        %733 = vperm.xlu0 %732, %v569
        %v734 = vpop.permute.xlu0 %733
        %v736 = vmul.f32 %v734, %v706
        %v737 = vmul.f32 %v734, %v707
        %v738 = vadd.f32 %v730, %v736
        %v739 = vadd.f32 %v731, %v737
        %s740 = scalar_lea.vmem [#allocation14], 6
        %v741 = vld [vmem:[%s740] sm:$0x3]
        %742 = vrot.lane.b32.xlu0 %v512, 2
        %v743 = vpop.permute.xlu0 %742
        %744 = vrot.lane.b32.xlu0 %v513, 2
        %v745 = vpop.permute.xlu0 %744
        %vm746 = vcmp.lt.s32.totalorder %v576, 2
        %v747 = vsel %vm746, %v743, %v745
        %v748 = vsel %vm746, %v745, %v743
        %v750 = vperm.slane %v741, 0
        %v751 = vperm.slane %v741, 1
        %v754 = vmul.f32 %v748, %v750
        %v755 = vmul.f32 %v747, %v751
        %756 = vrot.lane.b32.xlu0 %v567, 2
        %v757 = vpop.permute.xlu0 %756
        %758 = vrot.lane.b32.xlu0 %v568, 2
        %v759 = vpop.permute.xlu0 %758
        %v760 = vsel %vm746, %v757, %v759
        %v761 = vsel %vm746, %v759, %v757
        %v762 = vmul.f32 %v761, %v750
        %v763 = vmul.f32 %v760, %v751
        %764 = vset.pattern.permute.xlu0 12
        %765 = vperm.xlu0 %764, %v569
        %v766 = vpop.permute.xlu0 %765
        %v768 = vmul.f32 %v766, %v754
        %v769 = vmul.f32 %v766, %v755
        %v770 = vadd.f32 %v722, %v768
        %v771 = vadd.f32 %v723, %v769
        %772 = vset.pattern.permute.xlu0 13
        %773 = vperm.xlu0 %772, %v569
        %v774 = vpop.permute.xlu0 %773
        %v776 = vmul.f32 %v774, %v762
        %v777 = vmul.f32 %v774, %v763
        %v778 = vadd.f32 %v770, %v776
        %v779 = vadd.f32 %v771, %v777
        %780 = vset.pattern.permute.xlu0 14
        %781 = vperm.xlu0 %780, %v569
        %v782 = vpop.permute.xlu0 %781
        %v784 = vmul.f32 %v782, %v754
        %v785 = vmul.f32 %v782, %v755
        %v786 = vadd.f32 %v738, %v784
        %v787 = vadd.f32 %v739, %v785
        %788 = vset.pattern.permute.xlu0 15
        %789 = vperm.xlu0 %788, %v569
        %v790 = vpop.permute.xlu0 %789
        %v792 = vmul.f32 %v790, %v762
        %v793 = vmul.f32 %v790, %v763
        %v794 = vadd.f32 %v786, %v792
        %v795 = vadd.f32 %v787, %v793
        %s796 = scalar_lea.vmem [#allocation14], 8
        %v797 = vld [vmem:[%s796] sm:$0x3]
        %v799 = vperm.slane %v797, 0
        %v800 = vperm.slane %v797, 1
        %v803 = vmul.f32 %v512, %v799
        %v804 = vmul.f32 %v513, %v800
        %v805 = vmul.f32 %v567, %v799
        %v806 = vmul.f32 %v568, %v800
        %807 = vset.pattern.permute.xlu0 16
        %808 = vperm.xlu0 %807, %v569
        %v809 = vpop.permute.xlu0 %808
        %v811 = vmul.f32 %v809, %v803
        %v812 = vmul.f32 %v809, %v804
        %v813 = vadd.f32 %v778, %v811
        %v814 = vadd.f32 %v779, %v812
        %815 = vset.pattern.permute.xlu0 17
        %816 = vperm.xlu0 %815, %v569
        %v817 = vpop.permute.xlu0 %816
        %v819 = vmul.f32 %v817, %v805
        %v820 = vmul.f32 %v817, %v806
        %v821 = vadd.f32 %v813, %v819
        %v822 = vadd.f32 %v814, %v820
        %823 = vset.pattern.permute.xlu0 18
        %824 = vperm.xlu0 %823, %v569
        %v825 = vpop.permute.xlu0 %824
        %v827 = vmul.f32 %v825, %v803
        %v828 = vmul.f32 %v825, %v804
        %v829 = vadd.f32 %v794, %v827
        %v830 = vadd.f32 %v795, %v828
        %831 = vset.pattern.permute.xlu0 19
        %832 = vperm.xlu0 %831, %v569
        %v833 = vpop.permute.xlu0 %832
        %v835 = vmul.f32 %v833, %v805
        %v836 = vmul.f32 %v833, %v806
        %v837 = vadd.f32 %v829, %v835
        %v838 = vadd.f32 %v830, %v836
        %s839 = scalar_lea.vmem [#allocation14], 10
        %v840 = vld [vmem:[%s839] sm:$0x3]
        %841 = vrot.lane.b32.xlu0 %v512, 126
        %v842 = vpop.permute.xlu0 %841
        %843 = vrot.lane.b32.xlu0 %v513, 126
        %v844 = vpop.permute.xlu0 %843
        %vm845 = vcmp.lt.s32.totalorder %v576, 126
        %v846 = vsel %vm845, %v842, %v844
        %v847 = vsel %vm845, %v844, %v842
        %v849 = vperm.slane %v840, 0
        %v850 = vperm.slane %v840, 1
        %v853 = vmul.f32 %v846, %v849
        %v854 = vmul.f32 %v847, %v850
        %855 = vrot.lane.b32.xlu0 %v567, 126
        %v856 = vpop.permute.xlu0 %855
        %857 = vrot.lane.b32.xlu0 %v568, 126
        %v858 = vpop.permute.xlu0 %857
        %v859 = vsel %vm845, %v856, %v858
        %v860 = vsel %vm845, %v858, %v856
        %v861 = vmul.f32 %v859, %v849
        %v862 = vmul.f32 %v860, %v850
        %863 = vset.pattern.permute.xlu0 20
        %864 = vperm.xlu0 %863, %v569
        %v865 = vpop.permute.xlu0 %864
        %v867 = vmul.f32 %v865, %v853
        %v868 = vmul.f32 %v865, %v854
        %v869 = vadd.f32 %v821, %v867
        %v870 = vadd.f32 %v822, %v868
        %871 = vset.pattern.permute.xlu0 21
        %872 = vperm.xlu0 %871, %v569
        %v873 = vpop.permute.xlu0 %872
        %v875 = vmul.f32 %v873, %v861
        %v876 = vmul.f32 %v873, %v862
        %v877 = vadd.f32 %v869, %v875
        %v878 = vadd.f32 %v870, %v876
        %879 = vset.pattern.permute.xlu0 22
        %880 = vperm.xlu0 %879, %v569
        %v881 = vpop.permute.xlu0 %880
        %v883 = vmul.f32 %v881, %v853
        %v884 = vmul.f32 %v881, %v854
        %v885 = vadd.f32 %v837, %v883
        %v886 = vadd.f32 %v838, %v884
        %887 = vset.pattern.permute.xlu0 23
        %888 = vperm.xlu0 %887, %v569
        %v889 = vpop.permute.xlu0 %888
        %v891 = vmul.f32 %v889, %v861
        %v892 = vmul.f32 %v889, %v862
        %v893 = vadd.f32 %v885, %v891
        %v894 = vadd.f32 %v886, %v892
        %s895 = scalar_lea.vmem [#allocation14], 12
        %v896 = vld [vmem:[%s895] sm:$0x3]
        %897 = vrot.lane.b32.xlu0 %v512, 98
        %v898 = vpop.permute.xlu0 %897
        %899 = vrot.lane.b32.xlu0 %v513, 98
        %v900 = vpop.permute.xlu0 %899
        %vm901 = vcmp.lt.s32.totalorder %v576, 98
        %v902 = vsel %vm901, %v898, %v900
        %v903 = vsel %vm901, %v900, %v898
        %v905 = vperm.slane %v896, 0
        %v906 = vperm.slane %v896, 1
        %v909 = vmul.f32 %v902, %v905
        %v910 = vmul.f32 %v903, %v906
        %911 = vrot.lane.b32.xlu0 %v567, 98
        %v912 = vpop.permute.xlu0 %911
        %913 = vrot.lane.b32.xlu0 %v568, 98
        %v914 = vpop.permute.xlu0 %913
        %v915 = vsel %vm901, %v912, %v914
        %v916 = vsel %vm901, %v914, %v912
        %v917 = vmul.f32 %v915, %v905
        %v918 = vmul.f32 %v916, %v906
        %919 = vset.pattern.permute.xlu0 24
        %920 = vperm.xlu0 %919, %v569
        %v921 = vpop.permute.xlu0 %920
        %v923 = vmul.f32 %v921, %v909
        %v924 = vmul.f32 %v921, %v910
        %v925 = vadd.f32 %v877, %v923
        %v926 = vadd.f32 %v878, %v924
        %927 = vset.pattern.permute.xlu0 25
        %928 = vperm.xlu0 %927, %v569
        %v929 = vpop.permute.xlu0 %928
        %v931 = vmul.f32 %v929, %v917
        %v932 = vmul.f32 %v929, %v918
        %v933 = vadd.f32 %v925, %v931
        %v934 = vadd.f32 %v926, %v932
        %935 = vset.pattern.permute.xlu0 26
        %936 = vperm.xlu0 %935, %v569
        %v937 = vpop.permute.xlu0 %936
        %v939 = vmul.f32 %v937, %v909
        %v940 = vmul.f32 %v937, %v910
        %v941 = vadd.f32 %v893, %v939
        %v942 = vadd.f32 %v894, %v940
        %943 = vset.pattern.permute.xlu0 27
        %944 = vperm.xlu0 %943, %v569
        %v945 = vpop.permute.xlu0 %944
        %v947 = vmul.f32 %v945, %v917
        %v948 = vmul.f32 %v945, %v918
        %v949 = vadd.f32 %v941, %v947
        %v950 = vadd.f32 %v942, %v948
        %s951 = scalar_lea.vmem [#allocation14], 14
        %v952 = vld [vmem:[%s951] sm:$0x3]
        %953 = vrot.lane.b32.xlu0 %v512, 96
        %v954 = vpop.permute.xlu0 %953
        %955 = vrot.lane.b32.xlu0 %v513, 96
        %v956 = vpop.permute.xlu0 %955
        %vm957 = vcmp.lt.s32.totalorder %v576, 96
        %v958 = vsel %vm957, %v954, %v956
        %v959 = vsel %vm957, %v956, %v954
        %v961 = vperm.slane %v952, 0
        %v962 = vperm.slane %v952, 1
        %v965 = vmul.f32 %v958, %v961
        %v966 = vmul.f32 %v959, %v962
        %967 = vrot.lane.b32.xlu0 %v567, 96
        %v968 = vpop.permute.xlu0 %967
        %969 = vrot.lane.b32.xlu0 %v568, 96
        %v970 = vpop.permute.xlu0 %969
        %v971 = vsel %vm957, %v968, %v970
        %v972 = vsel %vm957, %v970, %v968
        %v973 = vmul.f32 %v971, %v961
        %v974 = vmul.f32 %v972, %v962
        %975 = vset.pattern.permute.xlu0 28
        %976 = vperm.xlu0 %975, %v569
        %v977 = vpop.permute.xlu0 %976
        %v979 = vmul.f32 %v977, %v965
        %v980 = vmul.f32 %v977, %v966
        %v981 = vadd.f32 %v933, %v979
        %v982 = vadd.f32 %v934, %v980
        %983 = vset.pattern.permute.xlu0 29
        %984 = vperm.xlu0 %983, %v569
        %v985 = vpop.permute.xlu0 %984
        %v987 = vmul.f32 %v985, %v973
        %v988 = vmul.f32 %v985, %v974
        %v989 = vadd.f32 %v981, %v987
        %v990 = vadd.f32 %v982, %v988
        %991 = vset.pattern.permute.xlu0 30
        %992 = vperm.xlu0 %991, %v569
        %v993 = vpop.permute.xlu0 %992
        %v995 = vmul.f32 %v993, %v965
        %v996 = vmul.f32 %v993, %v966
        %v997 = vadd.f32 %v949, %v995
        %v998 = vadd.f32 %v950, %v996
        %999 = vset.pattern.permute.xlu0 31
        %1000 = vperm.xlu0 %999, %v569
        %v1001 = vpop.permute.xlu0 %1000
        %v1003 = vmul.f32 %v1001, %v973
        %v1004 = vmul.f32 %v1001, %v974
        %v1005 = vadd.f32 %v997, %v1003
        %v1006 = vadd.f32 %v998, %v1004
        %s1007 = scalar_lea.vmem [#allocation14], 16
        %v1008 = vld [vmem:[%s1007] sm:$0x3]
        %1009 = vrot.lane.b32.xlu0 %v512, 94
        %v1010 = vpop.permute.xlu0 %1009
        %1011 = vrot.lane.b32.xlu0 %v513, 94
        %v1012 = vpop.permute.xlu0 %1011
        %vm1013 = vcmp.lt.s32.totalorder %v576, 94
        %v1014 = vsel %vm1013, %v1010, %v1012
        %v1015 = vsel %vm1013, %v1012, %v1010
        %v1017 = vperm.slane %v1008, 0
        %v1018 = vperm.slane %v1008, 1
        %v1021 = vmul.f32 %v1014, %v1017
        %v1022 = vmul.f32 %v1015, %v1018
        %1023 = vrot.lane.b32.xlu0 %v567, 94
        %v1024 = vpop.permute.xlu0 %1023
        %1025 = vrot.lane.b32.xlu0 %v568, 94
        %v1026 = vpop.permute.xlu0 %1025
        %v1027 = vsel %vm1013, %v1024, %v1026
        %v1028 = vsel %vm1013, %v1026, %v1024
        %v1029 = vmul.f32 %v1027, %v1017
        %v1030 = vmul.f32 %v1028, %v1018
        %1031 = vset.pattern.permute.xlu0 32
        %1032 = vperm.xlu0 %1031, %v569
        %v1033 = vpop.permute.xlu0 %1032
        %v1035 = vmul.f32 %v1033, %v1021
        %v1036 = vmul.f32 %v1033, %v1022
        %v1037 = vadd.f32 %v989, %v1035
        %v1038 = vadd.f32 %v990, %v1036
        %1039 = vset.pattern.permute.xlu0 33
        %1040 = vperm.xlu0 %1039, %v569
        %v1041 = vpop.permute.xlu0 %1040
        %v1043 = vmul.f32 %v1041, %v1029
        %v1044 = vmul.f32 %v1041, %v1030
        %v1045 = vadd.f32 %v1037, %v1043
        %v1046 = vadd.f32 %v1038, %v1044
        %1047 = vset.pattern.permute.xlu0 34
        %1048 = vperm.xlu0 %1047, %v569
        %v1049 = vpop.permute.xlu0 %1048
        %v1051 = vmul.f32 %v1049, %v1021
        %v1052 = vmul.f32 %v1049, %v1022
        %v1053 = vadd.f32 %v1005, %v1051
        %v1054 = vadd.f32 %v1006, %v1052
        %1055 = vset.pattern.permute.xlu0 35
        %1056 = vperm.xlu0 %1055, %v569
        %v1057 = vpop.permute.xlu0 %1056
        %v1059 = vmul.f32 %v1057, %v1029
        %v1060 = vmul.f32 %v1057, %v1030
        %v1061 = vadd.f32 %v1053, %v1059
        %v1062 = vadd.f32 %v1054, %v1060
        %v1063 = vmax.f32 %v1045, 0.0
        %v1064 = vmax.f32 %v1046, 0.0
        %v1065 = vmin.f32 %v1063, 6.0
        %v1066 = vmin.f32 %v1064, 6.0
        %v1067 = vmax.f32 %v1061, 0.0
        %v1068 = vmax.f32 %v1062, 0.0
        %v1069 = vmin.f32 %v1067, 6.0
        %v1070 = vmin.f32 %v1068, 6.0
        %v1071 = vld [vmem:[#allocation10] sm:$0xf]
        %v1072 = vld [vmem:[%s5] sm:$0xf]
        %v1074 = vsel %vm461, %v1072, 0
        %v1077 = vsel %vm465, %v1069, 0
        %v1080 = vsel %vm465, %v1070, 0
        %1082 = vmatpush.msra.mxu0 0.0
        %1083 = vmatpush.msra.mxu0 0.0
        %1084 = vmatpush.msra.mxu0 0.0
        %1085 = vmatpush.msra.mxu0 0.0
        %1086 = vmatpush.msra.mxu0 0.0
        %1087 = vmatpush.msra.mxu0 0.0
        %1088 = vmatpush.msra.mxu0 0.0
        %1089 = vmatpush.msra.mxu0 0.0
        %1090 = vmatpush.msra.mxu0 0.0
        %1091 = vmatpush.msra.mxu0 0.0
        %1092 = vmatpush.msra.mxu0 0.0
        %1093 = vmatpush.msra.mxu0 0.0
        %1094 = vmatpush.msra.mxu0 0.0
        %1095 = vmatpush.msra.mxu0 0.0
        %1096 = vmatpush.msra.mxu0 0.0
        %1097 = vmatpush.msra.mxu0 %v1077
        %1098 = vmatmul.f32.gmra.mxu0 %v1074
        %v1099 = vpop.f32.mrf.mxu0
        %v1100 = vadd.f32 0.0, %v1099
        %1101 = vdwg.mxu0
        %1102 = vmatpush.msra.mxu0 0.0
        %1103 = vmatpush.msra.mxu0 0.0
        %1104 = vmatpush.msra.mxu0 0.0
        %1105 = vmatpush.msra.mxu0 0.0
        %1106 = vmatpush.msra.mxu0 0.0
        %1107 = vmatpush.msra.mxu0 0.0
        %1108 = vmatpush.msra.mxu0 0.0
        %1109 = vmatpush.msra.mxu0 0.0
        %1110 = vmatpush.msra.mxu0 0.0
        %1111 = vmatpush.msra.mxu0 0.0
        %1112 = vmatpush.msra.mxu0 0.0
        %1113 = vmatpush.msra.mxu0 0.0
        %1114 = vmatpush.msra.mxu0 0.0
        %1115 = vmatpush.msra.mxu0 0.0
        %1116 = vmatpush.msra.mxu0 0.0
        %1117 = vmatpush.msra.mxu0 %v1080
        %1118 = vmatmul.f32.gmra.mxu0 %v1074
        %v1119 = vpop.f32.mrf.mxu0
        %v1120 = vadd.f32 0.0, %v1119
        %1121 = vdwg.mxu0
        %v1123 = vsel %vm461, %v1071, 0
        %v1126 = vsel %vm465, %v1065, 0
        %v1129 = vsel %vm465, %v1066, 0
        %1131 = vmatpush.msra.mxu0 0.0
        %1132 = vmatpush.msra.mxu0 0.0
        %1133 = vmatpush.msra.mxu0 0.0
        %1134 = vmatpush.msra.mxu0 0.0
        %1135 = vmatpush.msra.mxu0 0.0
        %1136 = vmatpush.msra.mxu0 0.0
        %1137 = vmatpush.msra.mxu0 0.0
        %1138 = vmatpush.msra.mxu0 0.0
        %1139 = vmatpush.msra.mxu0 0.0
        %1140 = vmatpush.msra.mxu0 0.0
        %1141 = vmatpush.msra.mxu0 0.0
        %1142 = vmatpush.msra.mxu0 0.0
        %1143 = vmatpush.msra.mxu0 0.0
        %1144 = vmatpush.msra.mxu0 0.0
        %1145 = vmatpush.msra.mxu0 0.0
        %1146 = vmatpush.msra.mxu0 %v1126
        %1147 = vmatmul.f32.gmra.mxu0 %v1123
        %v1148 = vpop.f32.mrf.mxu0
        %v1149 = vadd.f32 %v1100, %v1148
        %1150 = vdwg.mxu0
        %1151 = vmatpush.msra.mxu0 0.0
        %1152 = vmatpush.msra.mxu0 0.0
        %1153 = vmatpush.msra.mxu0 0.0
        %1154 = vmatpush.msra.mxu0 0.0
        %1155 = vmatpush.msra.mxu0 0.0
        %1156 = vmatpush.msra.mxu0 0.0
        %1157 = vmatpush.msra.mxu0 0.0
        %1158 = vmatpush.msra.mxu0 0.0
        %1159 = vmatpush.msra.mxu0 0.0
        %1160 = vmatpush.msra.mxu0 0.0
        %1161 = vmatpush.msra.mxu0 0.0
        %1162 = vmatpush.msra.mxu0 0.0
        %1163 = vmatpush.msra.mxu0 0.0
        %1164 = vmatpush.msra.mxu0 0.0
        %1165 = vmatpush.msra.mxu0 0.0
        %1166 = vmatpush.msra.mxu0 %v1129
        %1167 = vmatmul.f32.gmra.mxu0 %v1123
        %v1168 = vpop.f32.mrf.mxu0
        %v1169 = vadd.f32 %v1120, %v1168
        %1170 = vdwg.mxu0
        %v1171 = vld [vmem:[#allocation11] sm:$0xf]
        %1172 = vrot.lane.b32.xlu0 %v1149, 34
        %v1173 = vpop.permute.xlu0 %1172
        %1174 = vrot.lane.b32.xlu0 %v1169, 34
        %v1175 = vpop.permute.xlu0 %1174
        %v1176 = vsel %vm577, %v1173, %v1175
        %v1177 = vsel %vm577, %v1175, %v1173
        %v1178 = vmul.f32 %v1177, %v581
        %v1179 = vmul.f32 %v1176, %v582
        %1181 = vset.pattern.permute.xlu0 0
        %1182 = vperm.xlu0 %1181, %v1171
        %v1183 = vpop.permute.xlu0 %1182
        %v1185 = vmul.f32 %v1183, %v1178
        %v1186 = vmul.f32 %v1183, %v1179
        %v1187 = vadd.f32 %v1185, 0.0
        %v1188 = vadd.f32 %v1186, 0.0
        %1189 = vrot.lane.b32.xlu0 %v1149, 32
        %v1190 = vpop.permute.xlu0 %1189
        %1191 = vrot.lane.b32.xlu0 %v1169, 32
        %v1192 = vpop.permute.xlu0 %1191
        %v1193 = vsel %vm634, %v1190, %v1192
        %v1194 = vsel %vm634, %v1192, %v1190
        %v1195 = vmul.f32 %v1194, %v638
        %v1196 = vmul.f32 %v1193, %v639
        %1197 = vset.pattern.permute.xlu0 1
        %1198 = vperm.xlu0 %1197, %v1171
        %v1199 = vpop.permute.xlu0 %1198
        %v1201 = vmul.f32 %v1199, %v1195
        %v1202 = vmul.f32 %v1199, %v1196
        %v1203 = vadd.f32 %v1187, %v1201
        %v1204 = vadd.f32 %v1188, %v1202
        %1205 = vrot.lane.b32.xlu0 %v1149, 30
        %v1206 = vpop.permute.xlu0 %1205
        %1207 = vrot.lane.b32.xlu0 %v1169, 30
        %v1208 = vpop.permute.xlu0 %1207
        %v1209 = vsel %vm690, %v1206, %v1208
        %v1210 = vsel %vm690, %v1208, %v1206
        %v1211 = vmul.f32 %v1210, %v694
        %v1212 = vmul.f32 %v1209, %v695
        %1213 = vset.pattern.permute.xlu0 2
        %1214 = vperm.xlu0 %1213, %v1171
        %v1215 = vpop.permute.xlu0 %1214
        %v1217 = vmul.f32 %v1215, %v1211
        %v1218 = vmul.f32 %v1215, %v1212
        %v1219 = vadd.f32 %v1203, %v1217
        %v1220 = vadd.f32 %v1204, %v1218
        %1221 = vrot.lane.b32.xlu0 %v1149, 2
        %v1222 = vpop.permute.xlu0 %1221
        %1223 = vrot.lane.b32.xlu0 %v1169, 2
        %v1224 = vpop.permute.xlu0 %1223
        %v1225 = vsel %vm746, %v1222, %v1224
        %v1226 = vsel %vm746, %v1224, %v1222
        %v1227 = vmul.f32 %v1226, %v750
        %v1228 = vmul.f32 %v1225, %v751
        %1229 = vset.pattern.permute.xlu0 3
        %1230 = vperm.xlu0 %1229, %v1171
        %v1231 = vpop.permute.xlu0 %1230
        %v1233 = vmul.f32 %v1231, %v1227
        %v1234 = vmul.f32 %v1231, %v1228
        %v1235 = vadd.f32 %v1219, %v1233
        %v1236 = vadd.f32 %v1220, %v1234
        %v1237 = vmul.f32 %v1149, %v799
        %v1238 = vmul.f32 %v1169, %v800
        %1239 = vset.pattern.permute.xlu0 4
        %1240 = vperm.xlu0 %1239, %v1171
        %v1241 = vpop.permute.xlu0 %1240
        %v1243 = vmul.f32 %v1241, %v1237
        %v1244 = vmul.f32 %v1241, %v1238
        %v1245 = vadd.f32 %v1235, %v1243
        %v1246 = vadd.f32 %v1236, %v1244
        %1247 = vrot.lane.b32.xlu0 %v1149, 126
        %v1248 = vpop.permute.xlu0 %1247
        %1249 = vrot.lane.b32.xlu0 %v1169, 126
        %v1250 = vpop.permute.xlu0 %1249
        %v1251 = vsel %vm845, %v1248, %v1250
        %v1252 = vsel %vm845, %v1250, %v1248
        %v1253 = vmul.f32 %v1251, %v849
        %v1254 = vmul.f32 %v1252, %v850
        %1255 = vset.pattern.permute.xlu0 5
        %1256 = vperm.xlu0 %1255, %v1171
        %v1257 = vpop.permute.xlu0 %1256
        %v1259 = vmul.f32 %v1257, %v1253
        %v1260 = vmul.f32 %v1257, %v1254
        %v1261 = vadd.f32 %v1245, %v1259
        %v1262 = vadd.f32 %v1246, %v1260
        %1263 = vrot.lane.b32.xlu0 %v1149, 98
        %v1264 = vpop.permute.xlu0 %1263
        %1265 = vrot.lane.b32.xlu0 %v1169, 98
        %v1266 = vpop.permute.xlu0 %1265
        %v1267 = vsel %vm901, %v1264, %v1266
        %v1268 = vsel %vm901, %v1266, %v1264
        %v1269 = vmul.f32 %v1267, %v905
        %v1270 = vmul.f32 %v1268, %v906
        %1271 = vset.pattern.permute.xlu0 6
        %1272 = vperm.xlu0 %1271, %v1171
        %v1273 = vpop.permute.xlu0 %1272
        %v1275 = vmul.f32 %v1273, %v1269
        %v1276 = vmul.f32 %v1273, %v1270
        %v1277 = vadd.f32 %v1261, %v1275
        %v1278 = vadd.f32 %v1262, %v1276
        %1279 = vrot.lane.b32.xlu0 %v1149, 96
        %v1280 = vpop.permute.xlu0 %1279
        %1281 = vrot.lane.b32.xlu0 %v1169, 96
        %v1282 = vpop.permute.xlu0 %1281
        %v1283 = vsel %vm957, %v1280, %v1282
        %v1284 = vsel %vm957, %v1282, %v1280
        %v1285 = vmul.f32 %v1283, %v961
        %v1286 = vmul.f32 %v1284, %v962
        %1287 = vset.pattern.permute.xlu0 7
        %1288 = vperm.xlu0 %1287, %v1171
        %v1289 = vpop.permute.xlu0 %1288
        %v1291 = vmul.f32 %v1289, %v1285
        %v1292 = vmul.f32 %v1289, %v1286
        %v1293 = vadd.f32 %v1277, %v1291
        %v1294 = vadd.f32 %v1278, %v1292
        %1295 = vrot.lane.b32.xlu0 %v1149, 94
        %v1296 = vpop.permute.xlu0 %1295
        %1297 = vrot.lane.b32.xlu0 %v1169, 94
        %v1298 = vpop.permute.xlu0 %1297
        %v1299 = vsel %vm1013, %v1296, %v1298
        %v1300 = vsel %vm1013, %v1298, %v1296
        %v1301 = vmul.f32 %v1299, %v1017
        %v1302 = vmul.f32 %v1300, %v1018
        %1303 = vset.pattern.permute.xlu0 8
        %1304 = vperm.xlu0 %1303, %v1171
        %v1305 = vpop.permute.xlu0 %1304
        %v1307 = vmul.f32 %v1305, %v1301
        %v1308 = vmul.f32 %v1305, %v1302
        %v1309 = vadd.f32 %v1293, %v1307
        %v1310 = vadd.f32 %v1294, %v1308
        %v1311 = vmax.f32 %v1309, 0.0
        %v1312 = vmax.f32 %v1310, 0.0
        %v1313 = vmin.f32 %v1311, 6.0
        %v1314 = vmin.f32 %v1312, 6.0
        %v1315 = vld [vmem:[#allocation13] sm:$0xf]
        %1316 = vst [vmem:[#allocation1] ss:$2 sm:$0xff] %v455
        %v1317 = vld.sshfl [vmem:[#allocation1] sm:$0xff pattern:$0x75316420]
        %v1318 = vld.sshfl [vmem:[#allocation1 + $0x8] sm:$0xff pattern:$0x75316420]
        %v1322 = vsel %vm461, %v1315, 0
        %v1325 = vsel %vm465, %v1313, 0
        %v1328 = vsel %vm465, %v1314, 0
        %1330 = vmatpush.msra.mxu0 0.0
        %1331 = vmatpush.msra.mxu0 0.0
        %1332 = vmatpush.msra.mxu0 0.0
        %1333 = vmatpush.msra.mxu0 0.0
        %1334 = vmatpush.msra.mxu0 0.0
        %1335 = vmatpush.msra.mxu0 0.0
        %1336 = vmatpush.msra.mxu0 0.0
        %1337 = vmatpush.msra.mxu0 0.0
        %1338 = vmatpush.msra.mxu0 0.0
        %1339 = vmatpush.msra.mxu0 0.0
        %1340 = vmatpush.msra.mxu0 0.0
        %1341 = vmatpush.msra.mxu0 0.0
        %1342 = vmatpush.msra.mxu0 0.0
        %1343 = vmatpush.msra.mxu0 0.0
        %1344 = vmatpush.msra.mxu0 0.0
        %1345 = vmatpush.msra.mxu0 %v1325
        %1346 = vmatmul.f32.gmra.mxu0 %v1322
        %v1347 = vpop.f32.mrf.mxu0
        %v1348 = vadd.f32 %v1317, %v1347
        %1349 = vdwg.mxu0
        %1350 = vmatpush.msra.mxu0 0.0
        %1351 = vmatpush.msra.mxu0 0.0
        %1352 = vmatpush.msra.mxu0 0.0
        %1353 = vmatpush.msra.mxu0 0.0
        %1354 = vmatpush.msra.mxu0 0.0
        %1355 = vmatpush.msra.mxu0 0.0
        %1356 = vmatpush.msra.mxu0 0.0
        %1357 = vmatpush.msra.mxu0 0.0
        %1358 = vmatpush.msra.mxu0 0.0
        %1359 = vmatpush.msra.mxu0 0.0
        %1360 = vmatpush.msra.mxu0 0.0
        %1361 = vmatpush.msra.mxu0 0.0
        %1362 = vmatpush.msra.mxu0 0.0
        %1363 = vmatpush.msra.mxu0 0.0
        %1364 = vmatpush.msra.mxu0 0.0
        %1365 = vmatpush.msra.mxu0 %v1328
        %1366 = vmatmul.f32.gmra.mxu0 %v1322
        %v1367 = vpop.f32.mrf.mxu0
        %v1368 = vadd.f32 %v1318, %v1367
        %1369 = vdwg.mxu0
        %v1372 = vrot.slane %v1368, 4
        %v1373 = vsel %vm465, %v1348, %v1372
        %1375 = vst [vmem:[%s454] sm:$0xff] %v1373
        %s1376 = sand.u32 %s232, 1
        %s1377 = scalar_lea.sflag [#allocation4], %s1376
        %s1378 = sand.u32 %s232, 1
        %s1379 = smul.addr %s1378, 8
        %s1380 = scalar_lea.vmem [#allocation16], %s1379
        // Predicated region
        $region89: #{tpu_custom_call.1} parent=55 // pred_check
          %p1381 = pneg %p242
        $region90: #{tpu_custom_call.1} parent=55 // pred_check_branch
          %1383 = sbr.rel (%p1381) target = $region92
        $region91: #{tpu_custom_call.1} parent=55 // pred_region
          %1385 = vsyncadd %s1377, 0
          %s1386 = smul.addr %s30, 2
          %s1387 = smul.addr %s1386, 4
          %s1388 = scalar_lea.hbm %s9, %s1387
          %s1390 = sshll.u32 %s1380, 4
          %s1391 = int_to_ptr.vmem [resolvable:$true] %s1390
          %s1392 = sshll.u32 %s1388, 4
          %s1393 = int_to_ptr.hbm [resolvable:$true] %s1392
          %1395 = dma.vmem_to_hbm [thread:$0]  %s1391, 128, %s1393, %s1377
        $region92: #{tpu_custom_call.1} parent=55 // pred_fallthru
          _
      $region56: #{tpu_custom_call.1} parent=5 // pred_fallthru
        _
      %p1396 = scmp.le.s32.totalorder 2, %s25
      // Predicated region
      $region93: #{tpu_custom_call.1} parent=5 // pred_check
        %p1397 = pneg %p1396
      $region94: #{tpu_custom_call.1} parent=5 // pred_check_branch
        %1399 = sbr.rel (%p1397) target = $region96
      $region95: #{tpu_custom_call.1} parent=5 // pred_region
        %s1400 = ssub.s32 %s25, 2
        // Predicated region
        $region97: #{tpu_custom_call.1} parent=95 // pred_check
          %p1401 = pneg %p248
        $region98: #{tpu_custom_call.1} parent=95 // pred_check_branch
          %1403 = sbr.rel (%p1401) target = $region100
        $region99: #{tpu_custom_call.1} parent=95 // pred_region
          %s1404 = sand.u32 %s233, 1
          %s1405 = scalar_lea.sflag [#allocation4], %s1404
          %s1406 = sand.u32 %s233, 1
          %s1407 = smul.addr %s1406, 8
          %s1408 = scalar_lea.vmem [#allocation16], %s1407
          %1410 = dma.done %s1405, 128
        $region100: #{tpu_custom_call.1} parent=95 // pred_fallthru
          _
      $region96: #{tpu_custom_call.1} parent=5 // pred_fallthru
        _
    $region6: #{tpu_custom_call.1} parent=1 // loop_footer
      %s29 = sadd.s32 1, %s25
    $region7: #{tpu_custom_call.1} parent=1 // loop_footer_branch
      %24 = sbr.rel target = $region3
    $region8: #{tpu_custom_call.1} parent=1 // loop_exit
      _
    %1411 = vsyncpa [#allocation3], 1
    %s1412 = scalar_lea.sflag [#allocation3], 1
    %1413 = vsyncpa %s1412, 1
    %1414 = vsyncpa [#allocation6], 1
    %1415 = vsyncpa [#allocation9], 1
    %1416 = vsyncpa [#allocation12], 1
    %1417 = vsyncpa [#allocation15], 1
    %1418 = vsyncpa [#allocation4], 1
    %s1419 = scalar_lea.sflag [#allocation4], 1
    %1420 = vsyncpa %s1419, 1

</llo_original>
